<compile_context>
chip_gen: v7x
topology: tpu7x:2x2x1
jax: 0.10.0
libtpu: 0.0.40
codegen_flags: <defaults>
</compile_context>

<pallas_src>
import functools

import jax
import jax.numpy as jnp
from jax.experimental import pallas as pl
from jax.experimental.pallas import tpu as pltpu

EPS = 1e-5
LANE = 128
SUBLANE = 8


def _pad_to(x, m):
    return ((x + m - 1) // m) * m


# --------------------------------------------------------------------------
# Parameter packing (done once, outside the per-call hot path)
# --------------------------------------------------------------------------
def pack_params(params, n):
    """Pre-transpose, lane-align and pre-broadcast all parameters into one slab.

    Every tensor gets its own column tile starting at a multiple of 128 lanes.
    1-D parameters (and the two pos_proj weight columns) are replicated across
    the full padded lane width Np = pad(n, 128), so the kernel never has to
    broadcast along lanes at runtime.
    """
    pos_dim = params["w0"].shape[1]
    num_heads = params["w3"].shape[1]
    heads_padded = _pad_to(num_heads, SUBLANE)
    rows = max(_pad_to(pos_dim, SUBLANE), heads_padded)
    n_pad = _pad_to(n, LANE)

    def bcast(v):  # (r,) -> (r, n_pad) replicated across lanes
        v = v.astype(jnp.float32)
        return jnp.broadcast_to(v[:, None], (v.shape[0], n_pad))

    w0t = params["w0"].T.astype(jnp.float32)          # (pos_dim, 2)

    tiles = [
        ("w0c0", jnp.broadcast_to(w0t[:, 0:1], (pos_dim, n_pad))),
        ("w0c1", jnp.broadcast_to(w0t[:, 1:2], (pos_dim, n_pad))),
        ("b0", bcast(params["b0"])),
    ]
    for i in (1, 2, 3):
        tiles.append((f"g{i}", bcast(params[f"g{i}"])))
        tiles.append((f"be{i}", bcast(params[f"be{i}"])))
        tiles.append((f"w{i}", params[f"w{i}"].T.astype(jnp.float32)))  # (out, pd)
        tiles.append((f"b{i}", bcast(params[f"b{i}"])))

    # Lane-aligned column offsets (every tile starts at a multiple of 128).
    offsets, col = {}, 0
    for name, arr in tiles:
        offsets[name] = col
        col += _pad_to(arr.shape[1], LANE)

    slab = jnp.zeros((rows, col), jnp.float32)
    for name, arr in tiles:
        c = offsets[name]
        slab = slab.at[: arr.shape[0], c:c + arr.shape[1]].set(arr)

    return dict(slab=slab, offsets=offsets, pos_dim=pos_dim,
                num_heads=num_heads, heads_padded=heads_padded, n_pad=n_pad)


# --------------------------------------------------------------------------
# Kernel
# --------------------------------------------------------------------------
def _dpb_kernel(x_ref, p_ref, o_ref, *, pos_dim, heads_padded, x_row1, off):
    pd, hp = pos_dim, heads_padded
    np_ = o_ref.shape[1]                                 # padded lane width Np

    def full(name, r):                                   # pre-broadcast (r, Np) tile
        c = off[name]
        return p_ref[0:r, c:c + np_]

    def mat(name, r):                                    # transposed weight (r, pd)
        c = off[name]
        return p_ref[0:r, c:c + pd]

    # ---- pos_proj: Linear(2 -> pos_dim) as two pure VPU FMAs ---------------
    # x_ref rows [0:pd] hold bias coord 0 replicated across sublanes, rows
    # [x_row1:x_row1+pd] hold coord 1; all operands are full (r, Np) tiles.
    x0 = x_ref[0:pd, :]
    x1 = x_ref[x_row1:x_row1 + pd, :]
    h = full("w0c0", pd) * x0 + full("w0c1", pd) * x1 + full("b0", pd)

    def ln_relu(h, g, be):
        # One-pass LayerNorm statistics over the feature (sublane) axis + ReLU.
        m1 = jnp.mean(h, axis=0, keepdims=True)
        m2 = jnp.mean(h * h, axis=0, keepdims=True)
        var = m2 - m1 * m1
        hn = (h - m1) * jax.lax.rsqrt(var + EPS)
        return jnp.maximum(hn * g + be, 0.0)

    # ---- pos1 / pos2: LN -> ReLU -> Linear(pos_dim -> pos_dim) -------------
    for i in (1, 2):
        hn = ln_relu(h, full(f"g{i}", pd), full(f"be{i}", pd))
        h = jnp.dot(mat(f"w{i}", pd), hn,
                    preferred_element_type=jnp.float32,
                    precision=jax.lax.Precision.HIGHEST) + full(f"b{i}", pd)

    # ---- pos3: LN -> ReLU -> Linear(pos_dim -> num_heads) ------------------
    # w3^T / b3 rows past num_heads are zero, so padded output rows are zero.
    hn = ln_relu(h, full("g3", pd), full("be3", pd))
    out = jnp.dot(mat("w3", hp), hn,
                  preferred_element_type=jnp.float32,
                  precision=jax.lax.Precision.HIGHEST) + full("b3", hp)

    o_ref[...] = out.astype(o_ref.dtype)                 # unmasked 128-lane stores


# --------------------------------------------------------------------------
# Wrapper (pad / transpose / kernel / slice all under one jax.jit)
# --------------------------------------------------------------------------
def make_dynamic_pos_bias(params, n):
    """Returns a jitted fn: biases (N, 2) f32 -> (N, num_heads) f32."""
    packed = pack_params(params, n)
    pd = packed["pos_dim"]
    nh = packed["num_heads"]
    hp = packed["heads_padded"]
    n_pad = packed["n_pad"]
    slab = packed["slab"]
    x_row1 = _pad_to(pd, SUBLANE)                        # sublane-aligned start of coord 1

    kernel = functools.partial(_dpb_kernel, pos_dim=pd, heads_padded=hp,
                               x_row1=x_row1, off=packed["offsets"])
    vmem = pl.BlockSpec(memory_space=pltpu.MemorySpace.VMEM)
    call = pl.pallas_call(
        kernel,
        out_shape=jax.ShapeDtypeStruct((hp, n_pad), jnp.float32),
        in_specs=[vmem, vmem],
        out_specs=vmem,
    )

    @jax.jit
    def fwd(biases):
        nn = biases.shape[0]
        assert nn <= n_pad, "biases longer than the packed lane width"
        bt = biases.T.astype(jnp.float32)                # (2, N)
        # Lane-dense transposed input with each coordinate pre-broadcast across
        # pos_dim sublanes (moves the sublane broadcast off the kernel's XLU
        # critical path; fuses with the pad/transpose under this jit).
        x_t = jnp.zeros((2 * x_row1, n_pad), jnp.float32)
        x_t = x_t.at[0:pd, :nn].set(jnp.broadcast_to(bt[0:1], (pd, nn)))
        x_t = x_t.at[x_row1:x_row1 + pd, :nn].set(jnp.broadcast_to(bt[1:2], (pd, nn)))
        out_t = call(x_t, slab)                          # (heads_padded, Np)
        return out_t[:nh, :nn].T                         # PyTorch layout (N, num_heads)

    return fwd


# --------------------------------------------------------------------------
# Synthetic init + pure-JAX reference
# --------------------------------------------------------------------------
def init_params(key, dim, num_heads):
    pos_dim = dim // 4
    keys = jax.random.split(key, 8)

    def lin(kw, kb, fan_in, fan_out):
        w = jax.random.normal(kw, (fan_in, fan_out), jnp.float32) * 0.02
        b = jax.random.normal(kb, (fan_out,), jnp.float32) * 0.01
        return w, b

    w0, b0 = lin(keys[0], keys[4], 2, pos_dim)
    w1, b1 = lin(keys[1], keys[5], pos_dim, pos_dim)
    w2, b2 = lin(keys[2], keys[6], pos_dim, pos_dim)
    w3, b3 = lin(keys[3], keys[7], pos_dim, num_heads)

    kg = jax.random.split(keys[7], 6)
    g = lambda k: 1.0 + 0.1 * jax.random.normal(k, (pos_dim,), jnp.float32)
    be = lambda k: 0.02 * jax.random.normal(k, (pos_dim,), jnp.float32)

    return dict(
        w0=w0, b0=b0,
        g1=g(kg[0]), be1=be(kg[1]), w1=w1, b1=b1,
        g2=g(kg[2]), be2=be(kg[3]), w2=w2, b2=b2,
        g3=g(kg[4]), be3=be(kg[5]), w3=w3, b3=b3,
    )


def dynamic_pos_bias_ref(biases, p):
    """Pure-JAX reference of the PyTorch forward pass (full-precision dots)."""
    hi = jax.lax.Precision.HIGHEST

    def ln(x, g, b):
        mu = jnp.mean(x, -1, keepdims=True)
        var = jnp.mean((x - mu) ** 2, -1, keepdims=True)
        return (x - mu) / jnp.sqrt(var + EPS) * g + b

    h = jnp.dot(biases, p["w0"], precision=hi) + p["b0"]
    h = jnp.dot(jnp.maximum(ln(h, p["g1"], p["be1"]), 0.0), p["w1"], precision=hi) + p["b1"]
    h = jnp.dot(jnp.maximum(ln(h, p["g2"], p["be2"]), 0.0), p["w2"], precision=hi) + p["b2"]
    h = jnp.dot(jnp.maximum(ln(h, p["g3"], p["be3"]), 0.0), p["w3"], precision=hi) + p["b3"]
    return h


if __name__ == "__main__":
    key = jax.random.PRNGKey(0)
    k_in, k_params = jax.random.split(key)

    dim, num_heads = 32, 4             # pos_dim = 8
    N = 169                            # (2*7-1)^2 relative positions (deliberately non-aligned)

    biases = jax.random.uniform(k_in, (N, 2), jnp.float32, minval=-7.0, maxval=7.0)
    params = init_params(k_params, dim, num_heads)

    fwd = make_dynamic_pos_bias(params, N)     # one-time pack + jit
    out = jax.block_until_ready(fwd(biases))

    ref = dynamic_pos_bias_ref(biases, params)
    assert out.shape == (N, num_heads)
    max_err = float(jnp.max(jnp.abs(out - ref)))
    assert jnp.allclose(out, ref, atol=5e-5, rtol=1e-4), max_err

    print("KERNEL_OK")
</pallas_src>

<mosaic_0001>
module attributes {stable_mosaic.version = 11 : i64} {
  func.func @_dpb_kernel(%arg0: memref<16x256xf32, #tpu.memory_space<vmem>>, %arg1: memref<8x3456xf32, #tpu.memory_space<vmem>>, %arg2: memref<8x256xf32, #tpu.memory_space<vmem>>) attributes {dimension_semantics = [], scalar_prefetch = 0 : i64, scratch_operands = 0 : i64, tpu.core_type = #tpu.core_type<tc>} {
    %c0 = arith.constant 0 : index
    %c0_0 = arith.constant 0 : index
    %0 = vector.load %arg0[%c0, %c0_0] : memref<16x256xf32, #tpu.memory_space<vmem>>, vector<8x256xf32>
    %c8 = arith.constant 8 : index
    %c0_1 = arith.constant 0 : index
    %1 = vector.load %arg0[%c8, %c0_1] : memref<16x256xf32, #tpu.memory_space<vmem>>, vector<8x256xf32>
    %c0_2 = arith.constant 0 : index
    %c0_3 = arith.constant 0 : index
    %2 = vector.load %arg1[%c0_2, %c0_3] : memref<8x3456xf32, #tpu.memory_space<vmem>>, vector<8x256xf32>
    %3 = arith.mulf %2, %0 : vector<8x256xf32>
    %c0_4 = arith.constant 0 : index
    %c256 = arith.constant 256 : index
    %4 = vector.load %arg1[%c0_4, %c256] : memref<8x3456xf32, #tpu.memory_space<vmem>>, vector<8x256xf32>
    %5 = arith.mulf %4, %1 : vector<8x256xf32>
    %6 = arith.addf %3, %5 : vector<8x256xf32>
    %c0_5 = arith.constant 0 : index
    %c512 = arith.constant 512 : index
    %7 = vector.load %arg1[%c0_5, %c512] : memref<8x3456xf32, #tpu.memory_space<vmem>>, vector<8x256xf32>
    %8 = arith.addf %6, %7 : vector<8x256xf32>
    %c0_6 = arith.constant 0 : index
    %c768 = arith.constant 768 : index
    %9 = vector.load %arg1[%c0_6, %c768] : memref<8x3456xf32, #tpu.memory_space<vmem>>, vector<8x256xf32>
    %c0_7 = arith.constant 0 : index
    %c1024 = arith.constant 1024 : index
    %10 = vector.load %arg1[%c0_7, %c1024] : memref<8x3456xf32, #tpu.memory_space<vmem>>, vector<8x256xf32>
    %cst = arith.constant dense<0.000000e+00> : vector<256xf32>
    %11 = vector.multi_reduction <add>, %8, %cst [0] : vector<8x256xf32> to vector<256xf32>
    %12 = vector.shape_cast %11 : vector<256xf32> to vector<1x256xf32>
    %cst_8 = arith.constant 8.000000e+00 : f32
    %13 = vector.broadcast %cst_8 : f32 to vector<1x256xf32>
    %14 = arith.divf %12, %13 : vector<1x256xf32>
    %15 = arith.mulf %8, %8 : vector<8x256xf32>
    %cst_9 = arith.constant dense<0.000000e+00> : vector<256xf32>
    %16 = vector.multi_reduction <add>, %15, %cst_9 [0] : vector<8x256xf32> to vector<256xf32>
    %17 = vector.shape_cast %16 : vector<256xf32> to vector<1x256xf32>
    %cst_10 = arith.constant 8.000000e+00 : f32
    %18 = vector.broadcast %cst_10 : f32 to vector<1x256xf32>
    %19 = arith.divf %17, %18 : vector<1x256xf32>
    %20 = arith.mulf %14, %14 : vector<1x256xf32>
    %21 = arith.subf %19, %20 : vector<1x256xf32>
    %22 = vector.broadcast %14 : vector<1x256xf32> to vector<8x256xf32>
    %23 = arith.subf %8, %22 : vector<8x256xf32>
    %cst_11 = arith.constant 9.99999974E-6 : f32
    %24 = vector.broadcast %cst_11 : f32 to vector<1x256xf32>
    %25 = arith.addf %21, %24 : vector<1x256xf32>
    %26 = math.rsqrt %25 : vector<1x256xf32>
    %27 = vector.broadcast %26 : vector<1x256xf32> to vector<8x256xf32>
    %28 = arith.mulf %23, %27 : vector<8x256xf32>
    %29 = arith.mulf %28, %9 : vector<8x256xf32>
    %30 = arith.addf %29, %10 : vector<8x256xf32>
    %cst_12 = arith.constant 0.000000e+00 : f32
    %31 = vector.broadcast %cst_12 : f32 to vector<8x256xf32>
    %32 = arith.maximumf %30, %31 : vector<8x256xf32>
    %c0_13 = arith.constant 0 : index
    %c1280 = arith.constant 1280 : index
    %33 = vector.load %arg1[%c0_13, %c1280] : memref<8x3456xf32, #tpu.memory_space<vmem>>, vector<8x8xf32>
    %cst_14 = arith.constant dense<0.000000e+00> : vector<8x256xf32>
    %34 = tpu.matmul %33, %32, %cst_14 {dimension_numbers = #tpu.dot_dimension_numbers<[1], [0], [0], [1], [0, 0, 1, 1], [], []>, precision = #tpu.contract_precision<fp32>} : vector<8x8xf32>, vector<8x256xf32>, vector<8x256xf32> -> vector<8x256xf32>
    %c0_15 = arith.constant 0 : index
    %c1408 = arith.constant 1408 : index
    %35 = vector.load %arg1[%c0_15, %c1408] : memref<8x3456xf32, #tpu.memory_space<vmem>>, vector<8x256xf32>
    %36 = arith.addf %34, %35 : vector<8x256xf32>
    %c0_16 = arith.constant 0 : index
    %c1664 = arith.constant 1664 : index
    %37 = vector.load %arg1[%c0_16, %c1664] : memref<8x3456xf32, #tpu.memory_space<vmem>>, vector<8x256xf32>
    %c0_17 = arith.constant 0 : index
    %c1920 = arith.constant 1920 : index
    %38 = vector.load %arg1[%c0_17, %c1920] : memref<8x3456xf32, #tpu.memory_space<vmem>>, vector<8x256xf32>
    %cst_18 = arith.constant dense<0.000000e+00> : vector<256xf32>
    %39 = vector.multi_reduction <add>, %36, %cst_18 [0] : vector<8x256xf32> to vector<256xf32>
    %40 = vector.shape_cast %39 : vector<256xf32> to vector<1x256xf32>
    %cst_19 = arith.constant 8.000000e+00 : f32
    %41 = vector.broadcast %cst_19 : f32 to vector<1x256xf32>
    %42 = arith.divf %40, %41 : vector<1x256xf32>
    %43 = arith.mulf %36, %36 : vector<8x256xf32>
    %cst_20 = arith.constant dense<0.000000e+00> : vector<256xf32>
    %44 = vector.multi_reduction <add>, %43, %cst_20 [0] : vector<8x256xf32> to vector<256xf32>
    %45 = vector.shape_cast %44 : vector<256xf32> to vector<1x256xf32>
    %cst_21 = arith.constant 8.000000e+00 : f32
    %46 = vector.broadcast %cst_21 : f32 to vector<1x256xf32>
    %47 = arith.divf %45, %46 : vector<1x256xf32>
    %48 = arith.mulf %42, %42 : vector<1x256xf32>
    %49 = arith.subf %47, %48 : vector<1x256xf32>
    %50 = vector.broadcast %42 : vector<1x256xf32> to vector<8x256xf32>
    %51 = arith.subf %36, %50 : vector<8x256xf32>
    %cst_22 = arith.constant 9.99999974E-6 : f32
    %52 = vector.broadcast %cst_22 : f32 to vector<1x256xf32>
    %53 = arith.addf %49, %52 : vector<1x256xf32>
    %54 = math.rsqrt %53 : vector<1x256xf32>
    %55 = vector.broadcast %54 : vector<1x256xf32> to vector<8x256xf32>
    %56 = arith.mulf %51, %55 : vector<8x256xf32>
    %57 = arith.mulf %56, %37 : vector<8x256xf32>
    %58 = arith.addf %57, %38 : vector<8x256xf32>
    %cst_23 = arith.constant 0.000000e+00 : f32
    %59 = vector.broadcast %cst_23 : f32 to vector<8x256xf32>
    %60 = arith.maximumf %58, %59 : vector<8x256xf32>
    %c0_24 = arith.constant 0 : index
    %c2176 = arith.constant 2176 : index
    %61 = vector.load %arg1[%c0_24, %c2176] : memref<8x3456xf32, #tpu.memory_space<vmem>>, vector<8x8xf32>
    %cst_25 = arith.constant dense<0.000000e+00> : vector<8x256xf32>
    %62 = tpu.matmul %61, %60, %cst_25 {dimension_numbers = #tpu.dot_dimension_numbers<[1], [0], [0], [1], [0, 0, 1, 1], [], []>, precision = #tpu.contract_precision<fp32>} : vector<8x8xf32>, vector<8x256xf32>, vector<8x256xf32> -> vector<8x256xf32>
    %c0_26 = arith.constant 0 : index
    %c2304 = arith.constant 2304 : index
    %63 = vector.load %arg1[%c0_26, %c2304] : memref<8x3456xf32, #tpu.memory_space<vmem>>, vector<8x256xf32>
    %64 = arith.addf %62, %63 : vector<8x256xf32>
    %c0_27 = arith.constant 0 : index
    %c2560 = arith.constant 2560 : index
    %65 = vector.load %arg1[%c0_27, %c2560] : memref<8x3456xf32, #tpu.memory_space<vmem>>, vector<8x256xf32>
    %c0_28 = arith.constant 0 : index
    %c2816 = arith.constant 2816 : index
    %66 = vector.load %arg1[%c0_28, %c2816] : memref<8x3456xf32, #tpu.memory_space<vmem>>, vector<8x256xf32>
    %cst_29 = arith.constant dense<0.000000e+00> : vector<256xf32>
    %67 = vector.multi_reduction <add>, %64, %cst_29 [0] : vector<8x256xf32> to vector<256xf32>
    %68 = vector.shape_cast %67 : vector<256xf32> to vector<1x256xf32>
    %cst_30 = arith.constant 8.000000e+00 : f32
    %69 = vector.broadcast %cst_30 : f32 to vector<1x256xf32>
    %70 = arith.divf %68, %69 : vector<1x256xf32>
    %71 = arith.mulf %64, %64 : vector<8x256xf32>
    %cst_31 = arith.constant dense<0.000000e+00> : vector<256xf32>
    %72 = vector.multi_reduction <add>, %71, %cst_31 [0] : vector<8x256xf32> to vector<256xf32>
    %73 = vector.shape_cast %72 : vector<256xf32> to vector<1x256xf32>
    %cst_32 = arith.constant 8.000000e+00 : f32
    %74 = vector.broadcast %cst_32 : f32 to vector<1x256xf32>
    %75 = arith.divf %73, %74 : vector<1x256xf32>
    %76 = arith.mulf %70, %70 : vector<1x256xf32>
    %77 = arith.subf %75, %76 : vector<1x256xf32>
    %78 = vector.broadcast %70 : vector<1x256xf32> to vector<8x256xf32>
    %79 = arith.subf %64, %78 : vector<8x256xf32>
    %cst_33 = arith.constant 9.99999974E-6 : f32
    %80 = vector.broadcast %cst_33 : f32 to vector<1x256xf32>
    %81 = arith.addf %77, %80 : vector<1x256xf32>
    %82 = math.rsqrt %81 : vector<1x256xf32>
    %83 = vector.broadcast %82 : vector<1x256xf32> to vector<8x256xf32>
    %84 = arith.mulf %79, %83 : vector<8x256xf32>
    %85 = arith.mulf %84, %65 : vector<8x256xf32>
    %86 = arith.addf %85, %66 : vector<8x256xf32>
    %cst_34 = arith.constant 0.000000e+00 : f32
    %87 = vector.broadcast %cst_34 : f32 to vector<8x256xf32>
    %88 = arith.maximumf %86, %87 : vector<8x256xf32>
    %c0_35 = arith.constant 0 : index
    %c3072 = arith.constant 3072 : index
    %89 = vector.load %arg1[%c0_35, %c3072] : memref<8x3456xf32, #tpu.memory_space<vmem>>, vector<8x8xf32>
    %cst_36 = arith.constant dense<0.000000e+00> : vector<8x256xf32>
    %90 = tpu.matmul %89, %88, %cst_36 {dimension_numbers = #tpu.dot_dimension_numbers<[1], [0], [0], [1], [0, 0, 1, 1], [], []>, precision = #tpu.contract_precision<fp32>} : vector<8x8xf32>, vector<8x256xf32>, vector<8x256xf32> -> vector<8x256xf32>
    %c0_37 = arith.constant 0 : index
    %c3200 = arith.constant 3200 : index
    %91 = vector.load %arg1[%c0_37, %c3200] : memref<8x3456xf32, #tpu.memory_space<vmem>>, vector<8x256xf32>
    %92 = arith.addf %90, %91 : vector<8x256xf32>
    %c0_38 = arith.constant 0 : index
    %c0_39 = arith.constant 0 : index
    %93 = vector.load %arg2[%c0_38, %c0_39] : memref<8x256xf32, #tpu.memory_space<vmem>>, vector<8x256xf32>
    tpu.vector_store %arg2[%c0_38, %c0_39], %92 {strides = array<i32>} : memref<8x256xf32, #tpu.memory_space<vmem>>, vector<8x256xf32>,
    return
  }
}

</mosaic_0001>

<llo_original>
// kernel: fwd.1
$region0: #{fwd.1}
  #allocation0 [shape = 'u32[]', space=smem, size = 0x4, offset = 0x4, fixed_abs, tag = 'smem constant byte address 0x4 - core index']
  #allocation1 [shape = 'u32[144,128]{1,0:T(1,128)}', space=vmem, size = 0x12000, scoped, tag = 'internal scratch']
  %s0 = inlined_call_operand.vmem [shape: f32[16,256], index: 0, kind: input, shape index: {}]
  %s1 = inlined_call_operand.hbm [shape: f32[8,3456], index: 1, kind: input, shape index: {}]
  %s2 = inlined_call_operand.vmem [shape: f32[8,256], index: 2, kind: output, shape index: {}]
  %s3 = sld [smem:[#allocation0]]
  $region22: #{fwd.1} parent=0
    _
  %s5 = ssub.s32 1, %s3
  %s6 = scalar_select 0, %s5, %s3
  $region1: #{fwd.1} parent=0
    #allocation2 [shape = 'u8[110592]{0}', space=vmem, size = 0x1b000, scoped, tag = 'input window, operand 1, single buffered']
    #allocation3 [shape = 's32[1]{0}', space=sflag, size = 0x4, scoped, tag = 'scoped memory for fwd.1']
    %7 = vsyncpa [#allocation3], 0
    // Predicated region
    $region2: #{fwd.1} parent=1 // pred_check
      _
    $region3: #{fwd.1} parent=1 // pred_check_branch
      %9 = sbr.rel (0) target = $region5
    $region4: #{fwd.1} parent=1 // pred_region
      _
    $region5: #{fwd.1} parent=1 // pred_fallthru
      _
    // Predicated region
    $region6: #{fwd.1} parent=1 // pred_check
      _
    $region7: #{fwd.1} parent=1 // pred_check_branch
      %11 = sbr.rel (0) target = $region9
    $region8: #{fwd.1} parent=1 // pred_region
      %s13 = ssub.s32 3456, 3456
      %14 = vsyncadd [#allocation3], %s13
      %s16 = sshll.u32 [#allocation2], 4
      %s17 = int_to_ptr.vmem [resolvable:$true] %s16
      %19 = dma.hbm_to_vmem [thread:$0]  %s1, 3456, %s17, [#allocation3]
    $region9: #{fwd.1} parent=1 // pred_fallthru
      _
    // Predicated region
    $region10: #{fwd.1} parent=1 // pred_check
      _
    $region11: #{fwd.1} parent=1 // pred_check_branch
      %21 = sbr.rel (0) target = $region13
    $region12: #{fwd.1} parent=1 // pred_region
      %22 = dma.done [#allocation3], 3456
    $region13: #{fwd.1} parent=1 // pred_fallthru
      _
    %v23 = vld [vmem:[%s0] sm:$0xff]
    %v24 = vld [vmem:[%s0 + $0x8] sm:$0xff]
    %v25 = vld [vmem:[%s0 + $0x10] sm:$0xff]
    %v26 = vld [vmem:[%s0 + $0x18] sm:$0xff]
    %v27 = vld [vmem:[#allocation2] sm:$0xff]
    %v28 = vld [vmem:[#allocation2 + $0x8] sm:$0xff]
    %v29 = vmul.f32 %v27, %v23
    %v30 = vmul.f32 %v28, %v24
    %v31 = vld [vmem:[#allocation2 + $0x10] sm:$0xff]
    %v32 = vld [vmem:[#allocation2 + $0x18] sm:$0xff]
    %v33 = vmul.f32 %v31, %v25
    %v34 = vmul.f32 %v32, %v26
    %v35 = vadd.f32 %v29, %v33
    %v36 = vadd.f32 %v30, %v34
    %v37 = vld [vmem:[#allocation2 + $0x20] sm:$0xff]
    %v38 = vld [vmem:[#allocation2 + $0x28] sm:$0xff]
    %v39 = vadd.f32 %v35, %v37
    %v40 = vadd.f32 %v36, %v38
    %v41 = vld [vmem:[#allocation2 + $0x30] sm:$0xff]
    %v42 = vld [vmem:[#allocation2 + $0x38] sm:$0xff]
    %v43 = vld [vmem:[#allocation2 + $0x40] sm:$0xff]
    %v44 = vld [vmem:[#allocation2 + $0x48] sm:$0xff]
    %v45 = vrot.slane %v39, 4
    %v46 = vadd.f32 %v39, %v45
    %v47 = vrot.slane %v46, 2
    %v48 = vadd.f32 %v46, %v47
    %v49 = vrot.slane %v48, 1
    %v50 = vadd.f32 %v48, %v49
    %v51 = vrot.slane %v40, 4
    %v52 = vadd.f32 %v40, %v51
    %v53 = vrot.slane %v52, 2
    %v54 = vadd.f32 %v52, %v53
    %v55 = vrot.slane %v54, 1
    %v56 = vadd.f32 %v54, %v55
    %v57 = vrcp.pop 8.0
    %v58 = vmul.f32 %v50, %v57
    %v59 = vmul.f32 %v56, %v57
    %v60 = vmul.f32 %v39, %v39
    %v61 = vmul.f32 %v40, %v40
    %v62 = vrot.slane %v60, 4
    %v63 = vadd.f32 %v60, %v62
    %v64 = vrot.slane %v63, 2
    %v65 = vadd.f32 %v63, %v64
    %v66 = vrot.slane %v65, 1
    %v67 = vadd.f32 %v65, %v66
    %v68 = vrot.slane %v61, 4
    %v69 = vadd.f32 %v61, %v68
    %v70 = vrot.slane %v69, 2
    %v71 = vadd.f32 %v69, %v70
    %v72 = vrot.slane %v71, 1
    %v73 = vadd.f32 %v71, %v72
    %v74 = vmul.f32 %v67, %v57
    %v75 = vmul.f32 %v73, %v57
    %v76 = vmul.f32 %v58, %v58
    %v77 = vmul.f32 %v59, %v59
    %v78 = vsub.f32 %v74, %v76
    %v79 = vsub.f32 %v75, %v77
    %v80 = vsub.f32 %v39, %v58
    %v81 = vsub.f32 %v40, %v59
    %v82 = vadd.f32 %v78, 1e-05
    %v83 = vadd.f32 %v79, 1e-05
    %v84 = vrsqrt.pop %v82
    %v85 = vrsqrt.pop %v83
    %v86 = vmul.f32 %v80, %v84
    %v87 = vmul.f32 %v81, %v85
    %v88 = vmul.f32 %v86, %v41
    %v89 = vmul.f32 %v87, %v42
    %v90 = vadd.f32 %v88, %v43
    %v91 = vadd.f32 %v89, %v44
    %v92 = vmax.f32 %v90, 0.0
    %v93 = vmax.f32 %v91, 0.0
    %v94 = vld [vmem:[#allocation2 + $0x50] sm:$0xff]
    %v95 = vld [vmem:[#allocation2 + $0x58] sm:$0xff]
    %v96 = vld [vmem:[#allocation2 + $0x60] sm:$0xff]
    %vm97 = vcmask 64512
    %v99 = vsel %vm97, %v94, 0
    %v101 = vand.u32 %v93, 4294901760
    %102 = vmatprep.subr.mxu0 %v101
    %v103 = vand.u32 %v92, 4294901760
    %104 = vmatpush1.msra.mxu0 %v103
    %105 = vmatprep.subr.mxu0 0.0
    %106 = vmatpush1.msra.mxu0 0.0
    %107 = vmatprep.subr.mxu0 0.0
    %108 = vmatpush1.msra.mxu0 0.0
    %109 = vmatprep.subr.mxu0 0.0
    %110 = vmatpush1.msra.mxu0 0.0
    %111 = vmatprep.subr.mxu0 0.0
    %112 = vmatpush1.msra.mxu0 0.0
    %113 = vmatprep.subr.mxu0 0.0
    %114 = vmatpush1.msra.mxu0 0.0
    %115 = vmatprep.subr.mxu0 0.0
    %116 = vmatpush1.msra.mxu0 0.0
    %117 = vmatprep.subr.mxu0 0.0
    %118 = vmatpush1.msra.mxu0 0.0
    %119 = vmatprep.subr.mxu0 0.0
    %120 = vmatpush1.msra.mxu0 0.0
    %121 = vmatprep.subr.mxu0 0.0
    %122 = vmatpush1.msra.mxu0 0.0
    %123 = vmatprep.subr.mxu0 0.0
    %124 = vmatpush1.msra.mxu0 0.0
    %125 = vmatprep.subr.mxu0 0.0
    %126 = vmatpush1.msra.mxu0 0.0
    %127 = vmatprep.subr.mxu0 0.0
    %128 = vmatpush1.msra.mxu0 0.0
    %129 = vmatprep.subr.mxu0 0.0
    %130 = vmatpush1.msra.mxu0 0.0
    %131 = vmatprep.subr.mxu0 0.0
    %132 = vmatpush1.msra.mxu0 0.0
    %133 = vmatprep.subr.mxu0 0.0
    %134 = vmatpush1.msra.mxu0 0.0
    %135 = vmatprep.subr.mxu0 0.0
    %136 = vmatpush1.msra.mxu0 0.0
    %137 = vmatprep.subr.mxu0 0.0
    %138 = vmatpush1.msra.mxu0 0.0
    %139 = vmatprep.subr.mxu0 0.0
    %140 = vmatpush1.msra.mxu0 0.0
    %141 = vmatprep.subr.mxu0 0.0
    %142 = vmatpush1.msra.mxu0 0.0
    %143 = vmatprep.subr.mxu0 0.0
    %144 = vmatpush1.msra.mxu0 0.0
    %145 = vmatprep.subr.mxu0 0.0
    %146 = vmatpush1.msra.mxu0 0.0
    %147 = vmatprep.subr.mxu0 0.0
    %148 = vmatpush1.msra.mxu0 0.0
    %149 = vmatprep.subr.mxu0 0.0
    %150 = vmatpush1.msra.mxu0 0.0
    %151 = vmatprep.subr.mxu0 0.0
    %152 = vmatpush1.msra.mxu0 0.0
    %153 = vmatprep.subr.mxu0 0.0
    %154 = vmatpush1.msra.mxu0 0.0
    %155 = vmatprep.subr.mxu0 0.0
    %156 = vmatpush1.msra.mxu0 0.0
    %157 = vmatprep.subr.mxu0 0.0
    %158 = vmatpush1.msra.mxu0 0.0
    %159 = vmatprep.subr.mxu0 0.0
    %160 = vmatpush1.msra.mxu0 0.0
    %161 = vmatprep.subr.mxu0 0.0
    %162 = vmatpush1.msra.mxu0 0.0
    %163 = vmatprep.subr.mxu0 0.0
    %164 = vmatpush1.msra.mxu0 0.0
    %165 = vmatprep.subr.mxu0 0.0
    %166 = vmatpush1.msra.mxu0 0.0
    %167 = vmatprep.mubr.f32.mxu0 0.0
    %v168 = vand.u32 %v99, 4294901760
    %v169 = vsub.f32 %v99, %v168
    %v170 = vand.u32 %v169, 4294901760
    %v171 = vsub.f32 %v169, %v170
    %v172 = vand.u32 %v171, 4294901760
    %173 = vmatmul.mubr.f32.gmra.mrb[0].mxu0 %v172
    %v174 = vpop.f32.mrb[0].mxu0
    %v175 = vadd.f32 %v95, %v174
    %v176 = vpop.f32.mrb[0].mxu0
    %v177 = vadd.f32 %v96, %v176
    %178 = vdwg.mxu0
    %v179 = vand.u32 %v93, 4294901760
    %v180 = vsub.f32 %v93, %v179
    %v181 = vand.u32 %v180, 4294901760
    %v182 = vsub.f32 %v180, %v181
    %v183 = vand.u32 %v182, 4294901760
    %184 = vmatprep.subr.mxu0 %v183
    %v185 = vand.u32 %v92, 4294901760
    %v186 = vsub.f32 %v92, %v185
    %v187 = vand.u32 %v186, 4294901760
    %v188 = vsub.f32 %v186, %v187
    %v189 = vand.u32 %v188, 4294901760
    %190 = vmatpush1.msra.mxu0 %v189
    %191 = vmatprep.subr.mxu0 0.0
    %192 = vmatpush1.msra.mxu0 0.0
    %193 = vmatprep.subr.mxu0 0.0
    %194 = vmatpush1.msra.mxu0 0.0
    %195 = vmatprep.subr.mxu0 0.0
    %196 = vmatpush1.msra.mxu0 0.0
    %197 = vmatprep.subr.mxu0 0.0
    %198 = vmatpush1.msra.mxu0 0.0
    %199 = vmatprep.subr.mxu0 0.0
    %200 = vmatpush1.msra.mxu0 0.0
    %201 = vmatprep.subr.mxu0 0.0
    %202 = vmatpush1.msra.mxu0 0.0
    %203 = vmatprep.subr.mxu0 0.0
    %204 = vmatpush1.msra.mxu0 0.0
    %205 = vmatprep.subr.mxu0 0.0
    %206 = vmatpush1.msra.mxu0 0.0
    %207 = vmatprep.subr.mxu0 0.0
    %208 = vmatpush1.msra.mxu0 0.0
    %209 = vmatprep.subr.mxu0 0.0
    %210 = vmatpush1.msra.mxu0 0.0
    %211 = vmatprep.subr.mxu0 0.0
    %212 = vmatpush1.msra.mxu0 0.0
    %213 = vmatprep.subr.mxu0 0.0
    %214 = vmatpush1.msra.mxu0 0.0
    %215 = vmatprep.subr.mxu0 0.0
    %216 = vmatpush1.msra.mxu0 0.0
    %217 = vmatprep.subr.mxu0 0.0
    %218 = vmatpush1.msra.mxu0 0.0
    %219 = vmatprep.subr.mxu0 0.0
    %220 = vmatpush1.msra.mxu0 0.0
    %221 = vmatprep.subr.mxu0 0.0
    %222 = vmatpush1.msra.mxu0 0.0
    %223 = vmatprep.subr.mxu0 0.0
    %224 = vmatpush1.msra.mxu0 0.0
    %225 = vmatprep.subr.mxu0 0.0
    %226 = vmatpush1.msra.mxu0 0.0
    %227 = vmatprep.subr.mxu0 0.0
    %228 = vmatpush1.msra.mxu0 0.0
    %229 = vmatprep.subr.mxu0 0.0
    %230 = vmatpush1.msra.mxu0 0.0
    %231 = vmatprep.subr.mxu0 0.0
    %232 = vmatpush1.msra.mxu0 0.0
    %233 = vmatprep.subr.mxu0 0.0
    %234 = vmatpush1.msra.mxu0 0.0
    %235 = vmatprep.subr.mxu0 0.0
    %236 = vmatpush1.msra.mxu0 0.0
    %237 = vmatprep.subr.mxu0 0.0
    %238 = vmatpush1.msra.mxu0 0.0
    %239 = vmatprep.subr.mxu0 0.0
    %240 = vmatpush1.msra.mxu0 0.0
    %241 = vmatprep.subr.mxu0 0.0
    %242 = vmatpush1.msra.mxu0 0.0
    %243 = vmatprep.subr.mxu0 0.0
    %244 = vmatpush1.msra.mxu0 0.0
    %245 = vmatprep.subr.mxu0 0.0
    %246 = vmatpush1.msra.mxu0 0.0
    %247 = vmatprep.subr.mxu0 0.0
    %248 = vmatpush1.msra.mxu0 0.0
    %249 = vmatprep.subr.mxu0 0.0
    %250 = vmatpush1.msra.mxu0 0.0
    %251 = vmatprep.subr.mxu0 0.0
    %252 = vmatpush1.msra.mxu0 0.0
    %253 = vmatprep.mubr.f32.mxu0 0.0
    %v254 = vand.u32 %v99, 4294901760
    %255 = vmatmul.mubr.f32.gmra.mrb[0].mxu0 %v254
    %v256 = vpop.f32.mrb[0].mxu0
    %v257 = vadd.f32 %v175, %v256
    %v258 = vpop.f32.mrb[0].mxu0
    %v259 = vadd.f32 %v177, %v258
    %260 = vdwg.mxu0
    %v261 = vand.u32 %v93, 4294901760
    %v262 = vsub.f32 %v93, %v261
    %263 = vmatprep.subr.mxu0 %v262
    %v264 = vand.u32 %v92, 4294901760
    %v265 = vsub.f32 %v92, %v264
    %266 = vmatpush1.msra.mxu0 %v265
    %267 = vmatprep.subr.mxu0 0.0
    %268 = vmatpush1.msra.mxu0 0.0
    %269 = vmatprep.subr.mxu0 0.0
    %270 = vmatpush1.msra.mxu0 0.0
    %271 = vmatprep.subr.mxu0 0.0
    %272 = vmatpush1.msra.mxu0 0.0
    %273 = vmatprep.subr.mxu0 0.0
    %274 = vmatpush1.msra.mxu0 0.0
    %275 = vmatprep.subr.mxu0 0.0
    %276 = vmatpush1.msra.mxu0 0.0
    %277 = vmatprep.subr.mxu0 0.0
    %278 = vmatpush1.msra.mxu0 0.0
    %279 = vmatprep.subr.mxu0 0.0
    %280 = vmatpush1.msra.mxu0 0.0
    %281 = vmatprep.subr.mxu0 0.0
    %282 = vmatpush1.msra.mxu0 0.0
    %283 = vmatprep.subr.mxu0 0.0
    %284 = vmatpush1.msra.mxu0 0.0
    %285 = vmatprep.subr.mxu0 0.0
    %286 = vmatpush1.msra.mxu0 0.0
    %287 = vmatprep.subr.mxu0 0.0
    %288 = vmatpush1.msra.mxu0 0.0
    %289 = vmatprep.subr.mxu0 0.0
    %290 = vmatpush1.msra.mxu0 0.0
    %291 = vmatprep.subr.mxu0 0.0
    %292 = vmatpush1.msra.mxu0 0.0
    %293 = vmatprep.subr.mxu0 0.0
    %294 = vmatpush1.msra.mxu0 0.0
    %295 = vmatprep.subr.mxu0 0.0
    %296 = vmatpush1.msra.mxu0 0.0
    %297 = vmatprep.subr.mxu0 0.0
    %298 = vmatpush1.msra.mxu0 0.0
    %299 = vmatprep.subr.mxu0 0.0
    %300 = vmatpush1.msra.mxu0 0.0
    %301 = vmatprep.subr.mxu0 0.0
    %302 = vmatpush1.msra.mxu0 0.0
    %303 = vmatprep.subr.mxu0 0.0
    %304 = vmatpush1.msra.mxu0 0.0
    %305 = vmatprep.subr.mxu0 0.0
    %306 = vmatpush1.msra.mxu0 0.0
    %307 = vmatprep.subr.mxu0 0.0
    %308 = vmatpush1.msra.mxu0 0.0
    %309 = vmatprep.subr.mxu0 0.0
    %310 = vmatpush1.msra.mxu0 0.0
    %311 = vmatprep.subr.mxu0 0.0
    %312 = vmatpush1.msra.mxu0 0.0
    %313 = vmatprep.subr.mxu0 0.0
    %314 = vmatpush1.msra.mxu0 0.0
    %315 = vmatprep.subr.mxu0 0.0
    %316 = vmatpush1.msra.mxu0 0.0
    %317 = vmatprep.subr.mxu0 0.0
    %318 = vmatpush1.msra.mxu0 0.0
    %319 = vmatprep.subr.mxu0 0.0
    %320 = vmatpush1.msra.mxu0 0.0
    %321 = vmatprep.subr.mxu0 0.0
    %322 = vmatpush1.msra.mxu0 0.0
    %323 = vmatprep.subr.mxu0 0.0
    %324 = vmatpush1.msra.mxu0 0.0
    %325 = vmatprep.subr.mxu0 0.0
    %326 = vmatpush1.msra.mxu0 0.0
    %327 = vmatprep.subr.mxu0 0.0
    %328 = vmatpush1.msra.mxu0 0.0
    %329 = vmatprep.mubr.f32.mxu0 0.0
    %v330 = vand.u32 %v99, 4294901760
    %v331 = vsub.f32 %v99, %v330
    %332 = vmatmul.mubr.f32.gmra.mrb[0].mxu0 %v331
    %v333 = vpop.f32.mrb[0].mxu0
    %v334 = vadd.f32 %v257, %v333
    %v335 = vpop.f32.mrb[0].mxu0
    %v336 = vadd.f32 %v259, %v335
    %337 = vdwg.mxu0
    %v338 = vand.u32 %v93, 4294901760
    %339 = vmatprep.subr.mxu0 %v338
    %v340 = vand.u32 %v92, 4294901760
    %341 = vmatpush1.msra.mxu0 %v340
    %342 = vmatprep.subr.mxu0 0.0
    %343 = vmatpush1.msra.mxu0 0.0
    %344 = vmatprep.subr.mxu0 0.0
    %345 = vmatpush1.msra.mxu0 0.0
    %346 = vmatprep.subr.mxu0 0.0
    %347 = vmatpush1.msra.mxu0 0.0
    %348 = vmatprep.subr.mxu0 0.0
    %349 = vmatpush1.msra.mxu0 0.0
    %350 = vmatprep.subr.mxu0 0.0
    %351 = vmatpush1.msra.mxu0 0.0
    %352 = vmatprep.subr.mxu0 0.0
    %353 = vmatpush1.msra.mxu0 0.0
    %354 = vmatprep.subr.mxu0 0.0
    %355 = vmatpush1.msra.mxu0 0.0
    %356 = vmatprep.subr.mxu0 0.0
    %357 = vmatpush1.msra.mxu0 0.0
    %358 = vmatprep.subr.mxu0 0.0
    %359 = vmatpush1.msra.mxu0 0.0
    %360 = vmatprep.subr.mxu0 0.0
    %361 = vmatpush1.msra.mxu0 0.0
    %362 = vmatprep.subr.mxu0 0.0
    %363 = vmatpush1.msra.mxu0 0.0
    %364 = vmatprep.subr.mxu0 0.0
    %365 = vmatpush1.msra.mxu0 0.0
    %366 = vmatprep.subr.mxu0 0.0
    %367 = vmatpush1.msra.mxu0 0.0
    %368 = vmatprep.subr.mxu0 0.0
    %369 = vmatpush1.msra.mxu0 0.0
    %370 = vmatprep.subr.mxu0 0.0
    %371 = vmatpush1.msra.mxu0 0.0
    %372 = vmatprep.subr.mxu0 0.0
    %373 = vmatpush1.msra.mxu0 0.0
    %374 = vmatprep.subr.mxu0 0.0
    %375 = vmatpush1.msra.mxu0 0.0
    %376 = vmatprep.subr.mxu0 0.0
    %377 = vmatpush1.msra.mxu0 0.0
    %378 = vmatprep.subr.mxu0 0.0
    %379 = vmatpush1.msra.mxu0 0.0
    %380 = vmatprep.subr.mxu0 0.0
    %381 = vmatpush1.msra.mxu0 0.0
    %382 = vmatprep.subr.mxu0 0.0
    %383 = vmatpush1.msra.mxu0 0.0
    %384 = vmatprep.subr.mxu0 0.0
    %385 = vmatpush1.msra.mxu0 0.0
    %386 = vmatprep.subr.mxu0 0.0
    %387 = vmatpush1.msra.mxu0 0.0
    %388 = vmatprep.subr.mxu0 0.0
    %389 = vmatpush1.msra.mxu0 0.0
    %390 = vmatprep.subr.mxu0 0.0
    %391 = vmatpush1.msra.mxu0 0.0
    %392 = vmatprep.subr.mxu0 0.0
    %393 = vmatpush1.msra.mxu0 0.0
    %394 = vmatprep.subr.mxu0 0.0
    %395 = vmatpush1.msra.mxu0 0.0
    %396 = vmatprep.subr.mxu0 0.0
    %397 = vmatpush1.msra.mxu0 0.0
    %398 = vmatprep.subr.mxu0 0.0
    %399 = vmatpush1.msra.mxu0 0.0
    %400 = vmatprep.subr.mxu0 0.0
    %401 = vmatpush1.msra.mxu0 0.0
    %402 = vmatprep.subr.mxu0 0.0
    %403 = vmatpush1.msra.mxu0 0.0
    %404 = vmatprep.mubr.f32.mxu0 0.0
    %v405 = vand.u32 %v99, 4294901760
    %v406 = vsub.f32 %v99, %v405
    %v407 = vand.u32 %v406, 4294901760
    %408 = vmatmul.mubr.f32.gmra.mrb[0].mxu0 %v407
    %v409 = vpop.f32.mrb[0].mxu0
    %v410 = vadd.f32 %v334, %v409
    %v411 = vpop.f32.mrb[0].mxu0
    %v412 = vadd.f32 %v336, %v411
    %413 = vdwg.mxu0
    %v414 = vand.u32 %v93, 4294901760
    %v415 = vsub.f32 %v93, %v414
    %v416 = vand.u32 %v415, 4294901760
    %417 = vmatprep.subr.mxu0 %v416
    %v418 = vand.u32 %v92, 4294901760
    %v419 = vsub.f32 %v92, %v418
    %v420 = vand.u32 %v419, 4294901760
    %421 = vmatpush1.msra.mxu0 %v420
    %422 = vmatprep.subr.mxu0 0.0
    %423 = vmatpush1.msra.mxu0 0.0
    %424 = vmatprep.subr.mxu0 0.0
    %425 = vmatpush1.msra.mxu0 0.0
    %426 = vmatprep.subr.mxu0 0.0
    %427 = vmatpush1.msra.mxu0 0.0
    %428 = vmatprep.subr.mxu0 0.0
    %429 = vmatpush1.msra.mxu0 0.0
    %430 = vmatprep.subr.mxu0 0.0
    %431 = vmatpush1.msra.mxu0 0.0
    %432 = vmatprep.subr.mxu0 0.0
    %433 = vmatpush1.msra.mxu0 0.0
    %434 = vmatprep.subr.mxu0 0.0
    %435 = vmatpush1.msra.mxu0 0.0
    %436 = vmatprep.subr.mxu0 0.0
    %437 = vmatpush1.msra.mxu0 0.0
    %438 = vmatprep.subr.mxu0 0.0
    %439 = vmatpush1.msra.mxu0 0.0
    %440 = vmatprep.subr.mxu0 0.0
    %441 = vmatpush1.msra.mxu0 0.0
    %442 = vmatprep.subr.mxu0 0.0
    %443 = vmatpush1.msra.mxu0 0.0
    %444 = vmatprep.subr.mxu0 0.0
    %445 = vmatpush1.msra.mxu0 0.0
    %446 = vmatprep.subr.mxu0 0.0
    %447 = vmatpush1.msra.mxu0 0.0
    %448 = vmatprep.subr.mxu0 0.0
    %449 = vmatpush1.msra.mxu0 0.0
    %450 = vmatprep.subr.mxu0 0.0
    %451 = vmatpush1.msra.mxu0 0.0
    %452 = vmatprep.subr.mxu0 0.0
    %453 = vmatpush1.msra.mxu0 0.0
    %454 = vmatprep.subr.mxu0 0.0
    %455 = vmatpush1.msra.mxu0 0.0
    %456 = vmatprep.subr.mxu0 0.0
    %457 = vmatpush1.msra.mxu0 0.0
    %458 = vmatprep.subr.mxu0 0.0
    %459 = vmatpush1.msra.mxu0 0.0
    %460 = vmatprep.subr.mxu0 0.0
    %461 = vmatpush1.msra.mxu0 0.0
    %462 = vmatprep.subr.mxu0 0.0
    %463 = vmatpush1.msra.mxu0 0.0
    %464 = vmatprep.subr.mxu0 0.0
    %465 = vmatpush1.msra.mxu0 0.0
    %466 = vmatprep.subr.mxu0 0.0
    %467 = vmatpush1.msra.mxu0 0.0
    %468 = vmatprep.subr.mxu0 0.0
    %469 = vmatpush1.msra.mxu0 0.0
    %470 = vmatprep.subr.mxu0 0.0
    %471 = vmatpush1.msra.mxu0 0.0
    %472 = vmatprep.subr.mxu0 0.0
    %473 = vmatpush1.msra.mxu0 0.0
    %474 = vmatprep.subr.mxu0 0.0
    %475 = vmatpush1.msra.mxu0 0.0
    %476 = vmatprep.subr.mxu0 0.0
    %477 = vmatpush1.msra.mxu0 0.0
    %478 = vmatprep.subr.mxu0 0.0
    %479 = vmatpush1.msra.mxu0 0.0
    %480 = vmatprep.subr.mxu0 0.0
    %481 = vmatpush1.msra.mxu0 0.0
    %482 = vmatprep.subr.mxu0 0.0
    %483 = vmatpush1.msra.mxu0 0.0
    %484 = vmatprep.mubr.f32.mxu0 0.0
    %v485 = vand.u32 %v99, 4294901760
    %486 = vmatmul.mubr.f32.gmra.mrb[0].mxu0 %v485
    %v487 = vpop.f32.mrb[0].mxu0
    %v488 = vadd.f32 %v410, %v487
    %v489 = vpop.f32.mrb[0].mxu0
    %v490 = vadd.f32 %v412, %v489
    %491 = vdwg.mxu0
    %v492 = vand.u32 %v93, 4294901760
    %493 = vmatprep.subr.mxu0 %v492
    %v494 = vand.u32 %v92, 4294901760
    %495 = vmatpush1.msra.mxu0 %v494
    %496 = vmatprep.subr.mxu0 0.0
    %497 = vmatpush1.msra.mxu0 0.0
    %498 = vmatprep.subr.mxu0 0.0
    %499 = vmatpush1.msra.mxu0 0.0
    %500 = vmatprep.subr.mxu0 0.0
    %501 = vmatpush1.msra.mxu0 0.0
    %502 = vmatprep.subr.mxu0 0.0
    %503 = vmatpush1.msra.mxu0 0.0
    %504 = vmatprep.subr.mxu0 0.0
    %505 = vmatpush1.msra.mxu0 0.0
    %506 = vmatprep.subr.mxu0 0.0
    %507 = vmatpush1.msra.mxu0 0.0
    %508 = vmatprep.subr.mxu0 0.0
    %509 = vmatpush1.msra.mxu0 0.0
    %510 = vmatprep.subr.mxu0 0.0
    %511 = vmatpush1.msra.mxu0 0.0
    %512 = vmatprep.subr.mxu0 0.0
    %513 = vmatpush1.msra.mxu0 0.0
    %514 = vmatprep.subr.mxu0 0.0
    %515 = vmatpush1.msra.mxu0 0.0
    %516 = vmatprep.subr.mxu0 0.0
    %517 = vmatpush1.msra.mxu0 0.0
    %518 = vmatprep.subr.mxu0 0.0
    %519 = vmatpush1.msra.mxu0 0.0
    %520 = vmatprep.subr.mxu0 0.0
    %521 = vmatpush1.msra.mxu0 0.0
    %522 = vmatprep.subr.mxu0 0.0
    %523 = vmatpush1.msra.mxu0 0.0
    %524 = vmatprep.subr.mxu0 0.0
    %525 = vmatpush1.msra.mxu0 0.0
    %526 = vmatprep.subr.mxu0 0.0
    %527 = vmatpush1.msra.mxu0 0.0
    %528 = vmatprep.subr.mxu0 0.0
    %529 = vmatpush1.msra.mxu0 0.0
    %530 = vmatprep.subr.mxu0 0.0
    %531 = vmatpush1.msra.mxu0 0.0
    %532 = vmatprep.subr.mxu0 0.0
    %533 = vmatpush1.msra.mxu0 0.0
    %534 = vmatprep.subr.mxu0 0.0
    %535 = vmatpush1.msra.mxu0 0.0
    %536 = vmatprep.subr.mxu0 0.0
    %537 = vmatpush1.msra.mxu0 0.0
    %538 = vmatprep.subr.mxu0 0.0
    %539 = vmatpush1.msra.mxu0 0.0
    %540 = vmatprep.subr.mxu0 0.0
    %541 = vmatpush1.msra.mxu0 0.0
    %542 = vmatprep.subr.mxu0 0.0
    %543 = vmatpush1.msra.mxu0 0.0
    %544 = vmatprep.subr.mxu0 0.0
    %545 = vmatpush1.msra.mxu0 0.0
    %546 = vmatprep.subr.mxu0 0.0
    %547 = vmatpush1.msra.mxu0 0.0
    %548 = vmatprep.subr.mxu0 0.0
    %549 = vmatpush1.msra.mxu0 0.0
    %550 = vmatprep.subr.mxu0 0.0
    %551 = vmatpush1.msra.mxu0 0.0
    %552 = vmatprep.subr.mxu0 0.0
    %553 = vmatpush1.msra.mxu0 0.0
    %554 = vmatprep.subr.mxu0 0.0
    %555 = vmatpush1.msra.mxu0 0.0
    %556 = vmatprep.subr.mxu0 0.0
    %557 = vmatpush1.msra.mxu0 0.0
    %558 = vmatprep.mubr.f32.mxu0 0.0
    %v559 = vand.u32 %v99, 4294901760
    %560 = vmatmul.mubr.f32.gmra.mrb[0].mxu0 %v559
    %v561 = vpop.f32.mrb[0].mxu0
    %v562 = vadd.f32 %v488, %v561
    %v563 = vpop.f32.mrb[0].mxu0
    %v564 = vadd.f32 %v490, %v563
    %565 = vdwg.mxu0
    %v566 = vld [vmem:[#allocation2 + $0x68] sm:$0xff]
    %v567 = vld [vmem:[#allocation2 + $0x70] sm:$0xff]
    %v568 = vld [vmem:[#allocation2 + $0x78] sm:$0xff]
    %v569 = vld [vmem:[#allocation2 + $0x80] sm:$0xff]
    %v570 = vrot.slane %v562, 4
    %v571 = vadd.f32 %v562, %v570
    %v572 = vrot.slane %v571, 2
    %v573 = vadd.f32 %v571, %v572
    %v574 = vrot.slane %v573, 1
    %v575 = vadd.f32 %v573, %v574
    %v576 = vrot.slane %v564, 4
    %v577 = vadd.f32 %v564, %v576
    %v578 = vrot.slane %v577, 2
    %v579 = vadd.f32 %v577, %v578
    %v580 = vrot.slane %v579, 1
    %v581 = vadd.f32 %v579, %v580
    %v582 = vmul.f32 %v575, %v57
    %v583 = vmul.f32 %v581, %v57
    %v584 = vmul.f32 %v562, %v562
    %v585 = vmul.f32 %v564, %v564
    %v586 = vrot.slane %v584, 4
    %v587 = vadd.f32 %v584, %v586
    %v588 = vrot.slane %v587, 2
    %v589 = vadd.f32 %v587, %v588
    %v590 = vrot.slane %v589, 1
    %v591 = vadd.f32 %v589, %v590
    %v592 = vrot.slane %v585, 4
    %v593 = vadd.f32 %v585, %v592
    %v594 = vrot.slane %v593, 2
    %v595 = vadd.f32 %v593, %v594
    %v596 = vrot.slane %v595, 1
    %v597 = vadd.f32 %v595, %v596
    %v598 = vmul.f32 %v591, %v57
    %v599 = vmul.f32 %v597, %v57
    %v600 = vmul.f32 %v582, %v582
    %v601 = vmul.f32 %v583, %v583
    %v602 = vsub.f32 %v598, %v600
    %v603 = vsub.f32 %v599, %v601
    %v604 = vsub.f32 %v562, %v582
    %v605 = vsub.f32 %v564, %v583
    %v606 = vadd.f32 %v602, 1e-05
    %v607 = vadd.f32 %v603, 1e-05
    %v608 = vrsqrt.pop %v606
    %v609 = vrsqrt.pop %v607
    %v610 = vmul.f32 %v604, %v608
    %v611 = vmul.f32 %v605, %v609
    %v612 = vmul.f32 %v610, %v566
    %v613 = vmul.f32 %v611, %v567
    %v614 = vadd.f32 %v612, %v568
    %v615 = vadd.f32 %v613, %v569
    %v616 = vmax.f32 %v614, 0.0
    %v617 = vmax.f32 %v615, 0.0
    %v618 = vld [vmem:[#allocation2 + $0x88] sm:$0xff]
    %v619 = vld [vmem:[#allocation2 + $0x90] sm:$0xff]
    %v620 = vld [vmem:[#allocation2 + $0x98] sm:$0xff]
    %v622 = vsel %vm97, %v618, 0
    %v624 = vand.u32 %v617, 4294901760
    %625 = vmatprep.subr.mxu0 %v624
    %v626 = vand.u32 %v616, 4294901760
    %627 = vmatpush1.msra.mxu0 %v626
    %628 = vmatprep.subr.mxu0 0.0
    %629 = vmatpush1.msra.mxu0 0.0
    %630 = vmatprep.subr.mxu0 0.0
    %631 = vmatpush1.msra.mxu0 0.0
    %632 = vmatprep.subr.mxu0 0.0
    %633 = vmatpush1.msra.mxu0 0.0
    %634 = vmatprep.subr.mxu0 0.0
    %635 = vmatpush1.msra.mxu0 0.0
    %636 = vmatprep.subr.mxu0 0.0
    %637 = vmatpush1.msra.mxu0 0.0
    %638 = vmatprep.subr.mxu0 0.0
    %639 = vmatpush1.msra.mxu0 0.0
    %640 = vmatprep.subr.mxu0 0.0
    %641 = vmatpush1.msra.mxu0 0.0
    %642 = vmatprep.subr.mxu0 0.0
    %643 = vmatpush1.msra.mxu0 0.0
    %644 = vmatprep.subr.mxu0 0.0
    %645 = vmatpush1.msra.mxu0 0.0
    %646 = vmatprep.subr.mxu0 0.0
    %647 = vmatpush1.msra.mxu0 0.0
    %648 = vmatprep.subr.mxu0 0.0
    %649 = vmatpush1.msra.mxu0 0.0
    %650 = vmatprep.subr.mxu0 0.0
    %651 = vmatpush1.msra.mxu0 0.0
    %652 = vmatprep.subr.mxu0 0.0
    %653 = vmatpush1.msra.mxu0 0.0
    %654 = vmatprep.subr.mxu0 0.0
    %655 = vmatpush1.msra.mxu0 0.0
    %656 = vmatprep.subr.mxu0 0.0
    %657 = vmatpush1.msra.mxu0 0.0
    %658 = vmatprep.subr.mxu0 0.0
    %659 = vmatpush1.msra.mxu0 0.0
    %660 = vmatprep.subr.mxu0 0.0
    %661 = vmatpush1.msra.mxu0 0.0
    %662 = vmatprep.subr.mxu0 0.0
    %663 = vmatpush1.msra.mxu0 0.0
    %664 = vmatprep.subr.mxu0 0.0
    %665 = vmatpush1.msra.mxu0 0.0
    %666 = vmatprep.subr.mxu0 0.0
    %667 = vmatpush1.msra.mxu0 0.0
    %668 = vmatprep.subr.mxu0 0.0
    %669 = vmatpush1.msra.mxu0 0.0
    %670 = vmatprep.subr.mxu0 0.0
    %671 = vmatpush1.msra.mxu0 0.0
    %672 = vmatprep.subr.mxu0 0.0
    %673 = vmatpush1.msra.mxu0 0.0
    %674 = vmatprep.subr.mxu0 0.0
    %675 = vmatpush1.msra.mxu0 0.0
    %676 = vmatprep.subr.mxu0 0.0
    %677 = vmatpush1.msra.mxu0 0.0
    %678 = vmatprep.subr.mxu0 0.0
    %679 = vmatpush1.msra.mxu0 0.0
    %680 = vmatprep.subr.mxu0 0.0
    %681 = vmatpush1.msra.mxu0 0.0
    %682 = vmatprep.subr.mxu0 0.0
    %683 = vmatpush1.msra.mxu0 0.0
    %684 = vmatprep.subr.mxu0 0.0
    %685 = vmatpush1.msra.mxu0 0.0
    %686 = vmatprep.subr.mxu0 0.0
    %687 = vmatpush1.msra.mxu0 0.0
    %688 = vmatprep.subr.mxu0 0.0
    %689 = vmatpush1.msra.mxu0 0.0
    %690 = vmatprep.mubr.f32.mxu0 0.0
    %v691 = vand.u32 %v622, 4294901760
    %v692 = vsub.f32 %v622, %v691
    %v693 = vand.u32 %v692, 4294901760
    %v694 = vsub.f32 %v692, %v693
    %v695 = vand.u32 %v694, 4294901760
    %696 = vmatmul.mubr.f32.gmra.mrb[0].mxu0 %v695
    %v697 = vpop.f32.mrb[0].mxu0
    %v698 = vadd.f32 %v619, %v697
    %v699 = vpop.f32.mrb[0].mxu0
    %v700 = vadd.f32 %v620, %v699
    %701 = vdwg.mxu0
    %v702 = vand.u32 %v617, 4294901760
    %v703 = vsub.f32 %v617, %v702
    %v704 = vand.u32 %v703, 4294901760
    %v705 = vsub.f32 %v703, %v704
    %v706 = vand.u32 %v705, 4294901760
    %707 = vmatprep.subr.mxu0 %v706
    %v708 = vand.u32 %v616, 4294901760
    %v709 = vsub.f32 %v616, %v708
    %v710 = vand.u32 %v709, 4294901760
    %v711 = vsub.f32 %v709, %v710
    %v712 = vand.u32 %v711, 4294901760
    %713 = vmatpush1.msra.mxu0 %v712
    %714 = vmatprep.subr.mxu0 0.0
    %715 = vmatpush1.msra.mxu0 0.0
    %716 = vmatprep.subr.mxu0 0.0
    %717 = vmatpush1.msra.mxu0 0.0
    %718 = vmatprep.subr.mxu0 0.0
    %719 = vmatpush1.msra.mxu0 0.0
    %720 = vmatprep.subr.mxu0 0.0
    %721 = vmatpush1.msra.mxu0 0.0
    %722 = vmatprep.subr.mxu0 0.0
    %723 = vmatpush1.msra.mxu0 0.0
    %724 = vmatprep.subr.mxu0 0.0
    %725 = vmatpush1.msra.mxu0 0.0
    %726 = vmatprep.subr.mxu0 0.0
    %727 = vmatpush1.msra.mxu0 0.0
    %728 = vmatprep.subr.mxu0 0.0
    %729 = vmatpush1.msra.mxu0 0.0
    %730 = vmatprep.subr.mxu0 0.0
    %731 = vmatpush1.msra.mxu0 0.0
    %732 = vmatprep.subr.mxu0 0.0
    %733 = vmatpush1.msra.mxu0 0.0
    %734 = vmatprep.subr.mxu0 0.0
    %735 = vmatpush1.msra.mxu0 0.0
    %736 = vmatprep.subr.mxu0 0.0
    %737 = vmatpush1.msra.mxu0 0.0
    %738 = vmatprep.subr.mxu0 0.0
    %739 = vmatpush1.msra.mxu0 0.0
    %740 = vmatprep.subr.mxu0 0.0
    %741 = vmatpush1.msra.mxu0 0.0
    %742 = vmatprep.subr.mxu0 0.0
    %743 = vmatpush1.msra.mxu0 0.0
    %744 = vmatprep.subr.mxu0 0.0
    %745 = vmatpush1.msra.mxu0 0.0
    %746 = vmatprep.subr.mxu0 0.0
    %747 = vmatpush1.msra.mxu0 0.0
    %748 = vmatprep.subr.mxu0 0.0
    %749 = vmatpush1.msra.mxu0 0.0
    %750 = vmatprep.subr.mxu0 0.0
    %751 = vmatpush1.msra.mxu0 0.0
    %752 = vmatprep.subr.mxu0 0.0
    %753 = vmatpush1.msra.mxu0 0.0
    %754 = vmatprep.subr.mxu0 0.0
    %755 = vmatpush1.msra.mxu0 0.0
    %756 = vmatprep.subr.mxu0 0.0
    %757 = vmatpush1.msra.mxu0 0.0
    %758 = vmatprep.subr.mxu0 0.0
    %759 = vmatpush1.msra.mxu0 0.0
    %760 = vmatprep.subr.mxu0 0.0
    %761 = vmatpush1.msra.mxu0 0.0
    %762 = vmatprep.subr.mxu0 0.0
    %763 = vmatpush1.msra.mxu0 0.0
    %764 = vmatprep.subr.mxu0 0.0
    %765 = vmatpush1.msra.mxu0 0.0
    %766 = vmatprep.subr.mxu0 0.0
    %767 = vmatpush1.msra.mxu0 0.0
    %768 = vmatprep.subr.mxu0 0.0
    %769 = vmatpush1.msra.mxu0 0.0
    %770 = vmatprep.subr.mxu0 0.0
    %771 = vmatpush1.msra.mxu0 0.0
    %772 = vmatprep.subr.mxu0 0.0
    %773 = vmatpush1.msra.mxu0 0.0
    %774 = vmatprep.subr.mxu0 0.0
    %775 = vmatpush1.msra.mxu0 0.0
    %776 = vmatprep.mubr.f32.mxu0 0.0
    %v777 = vand.u32 %v622, 4294901760
    %778 = vmatmul.mubr.f32.gmra.mrb[0].mxu0 %v777
    %v779 = vpop.f32.mrb[0].mxu0
    %v780 = vadd.f32 %v698, %v779
    %v781 = vpop.f32.mrb[0].mxu0
    %v782 = vadd.f32 %v700, %v781
    %783 = vdwg.mxu0
    %v784 = vand.u32 %v617, 4294901760
    %v785 = vsub.f32 %v617, %v784
    %786 = vmatprep.subr.mxu0 %v785
    %v787 = vand.u32 %v616, 4294901760
    %v788 = vsub.f32 %v616, %v787
    %789 = vmatpush1.msra.mxu0 %v788
    %790 = vmatprep.subr.mxu0 0.0
    %791 = vmatpush1.msra.mxu0 0.0
    %792 = vmatprep.subr.mxu0 0.0
    %793 = vmatpush1.msra.mxu0 0.0
    %794 = vmatprep.subr.mxu0 0.0
    %795 = vmatpush1.msra.mxu0 0.0
    %796 = vmatprep.subr.mxu0 0.0
    %797 = vmatpush1.msra.mxu0 0.0
    %798 = vmatprep.subr.mxu0 0.0
    %799 = vmatpush1.msra.mxu0 0.0
    %800 = vmatprep.subr.mxu0 0.0
    %801 = vmatpush1.msra.mxu0 0.0
    %802 = vmatprep.subr.mxu0 0.0
    %803 = vmatpush1.msra.mxu0 0.0
    %804 = vmatprep.subr.mxu0 0.0
    %805 = vmatpush1.msra.mxu0 0.0
    %806 = vmatprep.subr.mxu0 0.0
    %807 = vmatpush1.msra.mxu0 0.0
    %808 = vmatprep.subr.mxu0 0.0
    %809 = vmatpush1.msra.mxu0 0.0
    %810 = vmatprep.subr.mxu0 0.0
    %811 = vmatpush1.msra.mxu0 0.0
    %812 = vmatprep.subr.mxu0 0.0
    %813 = vmatpush1.msra.mxu0 0.0
    %814 = vmatprep.subr.mxu0 0.0
    %815 = vmatpush1.msra.mxu0 0.0
    %816 = vmatprep.subr.mxu0 0.0
    %817 = vmatpush1.msra.mxu0 0.0
    %818 = vmatprep.subr.mxu0 0.0
    %819 = vmatpush1.msra.mxu0 0.0
    %820 = vmatprep.subr.mxu0 0.0
    %821 = vmatpush1.msra.mxu0 0.0
    %822 = vmatprep.subr.mxu0 0.0
    %823 = vmatpush1.msra.mxu0 0.0
    %824 = vmatprep.subr.mxu0 0.0
    %825 = vmatpush1.msra.mxu0 0.0
    %826 = vmatprep.subr.mxu0 0.0
    %827 = vmatpush1.msra.mxu0 0.0
    %828 = vmatprep.subr.mxu0 0.0
    %829 = vmatpush1.msra.mxu0 0.0
    %830 = vmatprep.subr.mxu0 0.0
    %831 = vmatpush1.msra.mxu0 0.0
    %832 = vmatprep.subr.mxu0 0.0
    %833 = vmatpush1.msra.mxu0 0.0
    %834 = vmatprep.subr.mxu0 0.0
    %835 = vmatpush1.msra.mxu0 0.0
    %836 = vmatprep.subr.mxu0 0.0
    %837 = vmatpush1.msra.mxu0 0.0
    %838 = vmatprep.subr.mxu0 0.0
    %839 = vmatpush1.msra.mxu0 0.0
    %840 = vmatprep.subr.mxu0 0.0
    %841 = vmatpush1.msra.mxu0 0.0
    %842 = vmatprep.subr.mxu0 0.0
    %843 = vmatpush1.msra.mxu0 0.0
    %844 = vmatprep.subr.mxu0 0.0
    %845 = vmatpush1.msra.mxu0 0.0
    %846 = vmatprep.subr.mxu0 0.0
    %847 = vmatpush1.msra.mxu0 0.0
    %848 = vmatprep.subr.mxu0 0.0
    %849 = vmatpush1.msra.mxu0 0.0
    %850 = vmatprep.subr.mxu0 0.0
    %851 = vmatpush1.msra.mxu0 0.0
    %852 = vmatprep.mubr.f32.mxu0 0.0
    %v853 = vand.u32 %v622, 4294901760
    %v854 = vsub.f32 %v622, %v853
    %855 = vmatmul.mubr.f32.gmra.mrb[0].mxu0 %v854
    %v856 = vpop.f32.mrb[0].mxu0
    %v857 = vadd.f32 %v780, %v856
    %v858 = vpop.f32.mrb[0].mxu0
    %v859 = vadd.f32 %v782, %v858
    %860 = vdwg.mxu0
    %v861 = vand.u32 %v617, 4294901760
    %862 = vmatprep.subr.mxu0 %v861
    %v863 = vand.u32 %v616, 4294901760
    %864 = vmatpush1.msra.mxu0 %v863
    %865 = vmatprep.subr.mxu0 0.0
    %866 = vmatpush1.msra.mxu0 0.0
    %867 = vmatprep.subr.mxu0 0.0
    %868 = vmatpush1.msra.mxu0 0.0
    %869 = vmatprep.subr.mxu0 0.0
    %870 = vmatpush1.msra.mxu0 0.0
    %871 = vmatprep.subr.mxu0 0.0
    %872 = vmatpush1.msra.mxu0 0.0
    %873 = vmatprep.subr.mxu0 0.0
    %874 = vmatpush1.msra.mxu0 0.0
    %875 = vmatprep.subr.mxu0 0.0
    %876 = vmatpush1.msra.mxu0 0.0
    %877 = vmatprep.subr.mxu0 0.0
    %878 = vmatpush1.msra.mxu0 0.0
    %879 = vmatprep.subr.mxu0 0.0
    %880 = vmatpush1.msra.mxu0 0.0
    %881 = vmatprep.subr.mxu0 0.0
    %882 = vmatpush1.msra.mxu0 0.0
    %883 = vmatprep.subr.mxu0 0.0
    %884 = vmatpush1.msra.mxu0 0.0
    %885 = vmatprep.subr.mxu0 0.0
    %886 = vmatpush1.msra.mxu0 0.0
    %887 = vmatprep.subr.mxu0 0.0
    %888 = vmatpush1.msra.mxu0 0.0
    %889 = vmatprep.subr.mxu0 0.0
    %890 = vmatpush1.msra.mxu0 0.0
    %891 = vmatprep.subr.mxu0 0.0
    %892 = vmatpush1.msra.mxu0 0.0
    %893 = vmatprep.subr.mxu0 0.0
    %894 = vmatpush1.msra.mxu0 0.0
    %895 = vmatprep.subr.mxu0 0.0
    %896 = vmatpush1.msra.mxu0 0.0
    %897 = vmatprep.subr.mxu0 0.0
    %898 = vmatpush1.msra.mxu0 0.0
    %899 = vmatprep.subr.mxu0 0.0
    %900 = vmatpush1.msra.mxu0 0.0
    %901 = vmatprep.subr.mxu0 0.0
    %902 = vmatpush1.msra.mxu0 0.0
    %903 = vmatprep.subr.mxu0 0.0
    %904 = vmatpush1.msra.mxu0 0.0
    %905 = vmatprep.subr.mxu0 0.0
    %906 = vmatpush1.msra.mxu0 0.0
    %907 = vmatprep.subr.mxu0 0.0
    %908 = vmatpush1.msra.mxu0 0.0
    %909 = vmatprep.subr.mxu0 0.0
    %910 = vmatpush1.msra.mxu0 0.0
    %911 = vmatprep.subr.mxu0 0.0
    %912 = vmatpush1.msra.mxu0 0.0
    %913 = vmatprep.subr.mxu0 0.0
    %914 = vmatpush1.msra.mxu0 0.0
    %915 = vmatprep.subr.mxu0 0.0
    %916 = vmatpush1.msra.mxu0 0.0
    %917 = vmatprep.subr.mxu0 0.0
    %918 = vmatpush1.msra.mxu0 0.0
    %919 = vmatprep.subr.mxu0 0.0
    %920 = vmatpush1.msra.mxu0 0.0
    %921 = vmatprep.subr.mxu0 0.0
    %922 = vmatpush1.msra.mxu0 0.0
    %923 = vmatprep.subr.mxu0 0.0
    %924 = vmatpush1.msra.mxu0 0.0
    %925 = vmatprep.subr.mxu0 0.0
    %926 = vmatpush1.msra.mxu0 0.0
    %927 = vmatprep.mubr.f32.mxu0 0.0
    %v928 = vand.u32 %v622, 4294901760
    %v929 = vsub.f32 %v622, %v928
    %v930 = vand.u32 %v929, 4294901760
    %931 = vmatmul.mubr.f32.gmra.mrb[0].mxu0 %v930
    %v932 = vpop.f32.mrb[0].mxu0
    %v933 = vadd.f32 %v857, %v932
    %v934 = vpop.f32.mrb[0].mxu0
    %v935 = vadd.f32 %v859, %v934
    %936 = vdwg.mxu0
    %v937 = vand.u32 %v617, 4294901760
    %v938 = vsub.f32 %v617, %v937
    %v939 = vand.u32 %v938, 4294901760
    %940 = vmatprep.subr.mxu0 %v939
    %v941 = vand.u32 %v616, 4294901760
    %v942 = vsub.f32 %v616, %v941
    %v943 = vand.u32 %v942, 4294901760
    %944 = vmatpush1.msra.mxu0 %v943
    %945 = vmatprep.subr.mxu0 0.0
    %946 = vmatpush1.msra.mxu0 0.0
    %947 = vmatprep.subr.mxu0 0.0
    %948 = vmatpush1.msra.mxu0 0.0
    %949 = vmatprep.subr.mxu0 0.0
    %950 = vmatpush1.msra.mxu0 0.0
    %951 = vmatprep.subr.mxu0 0.0
    %952 = vmatpush1.msra.mxu0 0.0
    %953 = vmatprep.subr.mxu0 0.0
    %954 = vmatpush1.msra.mxu0 0.0
    %955 = vmatprep.subr.mxu0 0.0
    %956 = vmatpush1.msra.mxu0 0.0
    %957 = vmatprep.subr.mxu0 0.0
    %958 = vmatpush1.msra.mxu0 0.0
    %959 = vmatprep.subr.mxu0 0.0
    %960 = vmatpush1.msra.mxu0 0.0
    %961 = vmatprep.subr.mxu0 0.0
    %962 = vmatpush1.msra.mxu0 0.0
    %963 = vmatprep.subr.mxu0 0.0
    %964 = vmatpush1.msra.mxu0 0.0
    %965 = vmatprep.subr.mxu0 0.0
    %966 = vmatpush1.msra.mxu0 0.0
    %967 = vmatprep.subr.mxu0 0.0
    %968 = vmatpush1.msra.mxu0 0.0
    %969 = vmatprep.subr.mxu0 0.0
    %970 = vmatpush1.msra.mxu0 0.0
    %971 = vmatprep.subr.mxu0 0.0
    %972 = vmatpush1.msra.mxu0 0.0
    %973 = vmatprep.subr.mxu0 0.0
    %974 = vmatpush1.msra.mxu0 0.0
    %975 = vmatprep.subr.mxu0 0.0
    %976 = vmatpush1.msra.mxu0 0.0
    %977 = vmatprep.subr.mxu0 0.0
    %978 = vmatpush1.msra.mxu0 0.0
    %979 = vmatprep.subr.mxu0 0.0
    %980 = vmatpush1.msra.mxu0 0.0
    %981 = vmatprep.subr.mxu0 0.0
    %982 = vmatpush1.msra.mxu0 0.0
    %983 = vmatprep.subr.mxu0 0.0
    %984 = vmatpush1.msra.mxu0 0.0
    %985 = vmatprep.subr.mxu0 0.0
    %986 = vmatpush1.msra.mxu0 0.0
    %987 = vmatprep.subr.mxu0 0.0
    %988 = vmatpush1.msra.mxu0 0.0
    %989 = vmatprep.subr.mxu0 0.0
    %990 = vmatpush1.msra.mxu0 0.0
    %991 = vmatprep.subr.mxu0 0.0
    %992 = vmatpush1.msra.mxu0 0.0
    %993 = vmatprep.subr.mxu0 0.0
    %994 = vmatpush1.msra.mxu0 0.0
    %995 = vmatprep.subr.mxu0 0.0
    %996 = vmatpush1.msra.mxu0 0.0
    %997 = vmatprep.subr.mxu0 0.0
    %998 = vmatpush1.msra.mxu0 0.0
    %999 = vmatprep.subr.mxu0 0.0
    %1000 = vmatpush1.msra.mxu0 0.0
    %1001 = vmatprep.subr.mxu0 0.0
    %1002 = vmatpush1.msra.mxu0 0.0
    %1003 = vmatprep.subr.mxu0 0.0
    %1004 = vmatpush1.msra.mxu0 0.0
    %1005 = vmatprep.subr.mxu0 0.0
    %1006 = vmatpush1.msra.mxu0 0.0
    %1007 = vmatprep.mubr.f32.mxu0 0.0
    %v1008 = vand.u32 %v622, 4294901760
    %1009 = vmatmul.mubr.f32.gmra.mrb[0].mxu0 %v1008
    %v1010 = vpop.f32.mrb[0].mxu0
    %v1011 = vadd.f32 %v933, %v1010
    %v1012 = vpop.f32.mrb[0].mxu0
    %v1013 = vadd.f32 %v935, %v1012
    %1014 = vdwg.mxu0
    %v1015 = vand.u32 %v617, 4294901760
    %1016 = vmatprep.subr.mxu0 %v1015
    %v1017 = vand.u32 %v616, 4294901760
    %1018 = vmatpush1.msra.mxu0 %v1017
    %1019 = vmatprep.subr.mxu0 0.0
    %1020 = vmatpush1.msra.mxu0 0.0
    %1021 = vmatprep.subr.mxu0 0.0
    %1022 = vmatpush1.msra.mxu0 0.0
    %1023 = vmatprep.subr.mxu0 0.0
    %1024 = vmatpush1.msra.mxu0 0.0
    %1025 = vmatprep.subr.mxu0 0.0
    %1026 = vmatpush1.msra.mxu0 0.0
    %1027 = vmatprep.subr.mxu0 0.0
    %1028 = vmatpush1.msra.mxu0 0.0
    %1029 = vmatprep.subr.mxu0 0.0
    %1030 = vmatpush1.msra.mxu0 0.0
    %1031 = vmatprep.subr.mxu0 0.0
    %1032 = vmatpush1.msra.mxu0 0.0
    %1033 = vmatprep.subr.mxu0 0.0
    %1034 = vmatpush1.msra.mxu0 0.0
    %1035 = vmatprep.subr.mxu0 0.0
    %1036 = vmatpush1.msra.mxu0 0.0
    %1037 = vmatprep.subr.mxu0 0.0
    %1038 = vmatpush1.msra.mxu0 0.0
    %1039 = vmatprep.subr.mxu0 0.0
    %1040 = vmatpush1.msra.mxu0 0.0
    %1041 = vmatprep.subr.mxu0 0.0
    %1042 = vmatpush1.msra.mxu0 0.0
    %1043 = vmatprep.subr.mxu0 0.0
    %1044 = vmatpush1.msra.mxu0 0.0
    %1045 = vmatprep.subr.mxu0 0.0
    %1046 = vmatpush1.msra.mxu0 0.0
    %1047 = vmatprep.subr.mxu0 0.0
    %1048 = vmatpush1.msra.mxu0 0.0
    %1049 = vmatprep.subr.mxu0 0.0
    %1050 = vmatpush1.msra.mxu0 0.0
    %1051 = vmatprep.subr.mxu0 0.0
    %1052 = vmatpush1.msra.mxu0 0.0
    %1053 = vmatprep.subr.mxu0 0.0
    %1054 = vmatpush1.msra.mxu0 0.0
    %1055 = vmatprep.subr.mxu0 0.0
    %1056 = vmatpush1.msra.mxu0 0.0
    %1057 = vmatprep.subr.mxu0 0.0
    %1058 = vmatpush1.msra.mxu0 0.0
    %1059 = vmatprep.subr.mxu0 0.0
    %1060 = vmatpush1.msra.mxu0 0.0
    %1061 = vmatprep.subr.mxu0 0.0
    %1062 = vmatpush1.msra.mxu0 0.0
    %1063 = vmatprep.subr.mxu0 0.0
    %1064 = vmatpush1.msra.mxu0 0.0
    %1065 = vmatprep.subr.mxu0 0.0
    %1066 = vmatpush1.msra.mxu0 0.0
    %1067 = vmatprep.subr.mxu0 0.0
    %1068 = vmatpush1.msra.mxu0 0.0
    %1069 = vmatprep.subr.mxu0 0.0
    %1070 = vmatpush1.msra.mxu0 0.0
    %1071 = vmatprep.subr.mxu0 0.0
    %1072 = vmatpush1.msra.mxu0 0.0
    %1073 = vmatprep.subr.mxu0 0.0
    %1074 = vmatpush1.msra.mxu0 0.0
    %1075 = vmatprep.subr.mxu0 0.0
    %1076 = vmatpush1.msra.mxu0 0.0
    %1077 = vmatprep.subr.mxu0 0.0
    %1078 = vmatpush1.msra.mxu0 0.0
    %1079 = vmatprep.subr.mxu0 0.0
    %1080 = vmatpush1.msra.mxu0 0.0
    %1081 = vmatprep.mubr.f32.mxu0 0.0
    %v1082 = vand.u32 %v622, 4294901760
    %1083 = vmatmul.mubr.f32.gmra.mrb[0].mxu0 %v1082
    %v1084 = vpop.f32.mrb[0].mxu0
    %v1085 = vadd.f32 %v1011, %v1084
    %v1086 = vpop.f32.mrb[0].mxu0
    %v1087 = vadd.f32 %v1013, %v1086
    %1088 = vdwg.mxu0
    %v1089 = vld [vmem:[#allocation2 + $0xa0] sm:$0xff]
    %v1090 = vld [vmem:[#allocation2 + $0xa8] sm:$0xff]
    %v1091 = vld [vmem:[#allocation2 + $0xb0] sm:$0xff]
    %v1092 = vld [vmem:[#allocation2 + $0xb8] sm:$0xff]
    %v1093 = vrot.slane %v1085, 4
    %v1094 = vadd.f32 %v1085, %v1093
    %v1095 = vrot.slane %v1094, 2
    %v1096 = vadd.f32 %v1094, %v1095
    %v1097 = vrot.slane %v1096, 1
    %v1098 = vadd.f32 %v1096, %v1097
    %v1099 = vrot.slane %v1087, 4
    %v1100 = vadd.f32 %v1087, %v1099
    %v1101 = vrot.slane %v1100, 2
    %v1102 = vadd.f32 %v1100, %v1101
    %v1103 = vrot.slane %v1102, 1
    %v1104 = vadd.f32 %v1102, %v1103
    %v1105 = vmul.f32 %v1098, %v57
    %v1106 = vmul.f32 %v1104, %v57
    %v1107 = vmul.f32 %v1085, %v1085
    %v1108 = vmul.f32 %v1087, %v1087
    %v1109 = vrot.slane %v1107, 4
    %v1110 = vadd.f32 %v1107, %v1109
    %v1111 = vrot.slane %v1110, 2
    %v1112 = vadd.f32 %v1110, %v1111
    %v1113 = vrot.slane %v1112, 1
    %v1114 = vadd.f32 %v1112, %v1113
    %v1115 = vrot.slane %v1108, 4
    %v1116 = vadd.f32 %v1108, %v1115
    %v1117 = vrot.slane %v1116, 2
    %v1118 = vadd.f32 %v1116, %v1117
    %v1119 = vrot.slane %v1118, 1
    %v1120 = vadd.f32 %v1118, %v1119
    %v1121 = vmul.f32 %v1114, %v57
    %v1122 = vmul.f32 %v1120, %v57
    %v1123 = vmul.f32 %v1105, %v1105
    %v1124 = vmul.f32 %v1106, %v1106
    %v1125 = vsub.f32 %v1121, %v1123
    %v1126 = vsub.f32 %v1122, %v1124
    %v1127 = vsub.f32 %v1085, %v1105
    %v1128 = vsub.f32 %v1087, %v1106
    %v1129 = vadd.f32 %v1125, 1e-05
    %v1130 = vadd.f32 %v1126, 1e-05
    %v1131 = vrsqrt.pop %v1129
    %v1132 = vrsqrt.pop %v1130
    %v1133 = vmul.f32 %v1127, %v1131
    %v1134 = vmul.f32 %v1128, %v1132
    %v1135 = vmul.f32 %v1133, %v1089
    %v1136 = vmul.f32 %v1134, %v1090
    %v1137 = vadd.f32 %v1135, %v1091
    %v1138 = vadd.f32 %v1136, %v1092
    %v1139 = vmax.f32 %v1137, 0.0
    %v1140 = vmax.f32 %v1138, 0.0
    %v1141 = vld [vmem:[#allocation2 + $0xc0] sm:$0xff]
    %v1142 = vld [vmem:[#allocation2 + $0xc8] sm:$0xff]
    %v1143 = vld [vmem:[#allocation2 + $0xd0] sm:$0xff]
    %v1145 = vsel %vm97, %v1141, 0
    %v1147 = vand.u32 %v1140, 4294901760
    %1148 = vmatprep.subr.mxu0 %v1147
    %v1149 = vand.u32 %v1139, 4294901760
    %1150 = vmatpush1.msra.mxu0 %v1149
    %1151 = vmatprep.subr.mxu0 0.0
    %1152 = vmatpush1.msra.mxu0 0.0
    %1153 = vmatprep.subr.mxu0 0.0
    %1154 = vmatpush1.msra.mxu0 0.0
    %1155 = vmatprep.subr.mxu0 0.0
    %1156 = vmatpush1.msra.mxu0 0.0
    %1157 = vmatprep.subr.mxu0 0.0
    %1158 = vmatpush1.msra.mxu0 0.0
    %1159 = vmatprep.subr.mxu0 0.0
    %1160 = vmatpush1.msra.mxu0 0.0
    %1161 = vmatprep.subr.mxu0 0.0
    %1162 = vmatpush1.msra.mxu0 0.0
    %1163 = vmatprep.subr.mxu0 0.0
    %1164 = vmatpush1.msra.mxu0 0.0
    %1165 = vmatprep.subr.mxu0 0.0
    %1166 = vmatpush1.msra.mxu0 0.0
    %1167 = vmatprep.subr.mxu0 0.0
    %1168 = vmatpush1.msra.mxu0 0.0
    %1169 = vmatprep.subr.mxu0 0.0
    %1170 = vmatpush1.msra.mxu0 0.0
    %1171 = vmatprep.subr.mxu0 0.0
    %1172 = vmatpush1.msra.mxu0 0.0
    %1173 = vmatprep.subr.mxu0 0.0
    %1174 = vmatpush1.msra.mxu0 0.0
    %1175 = vmatprep.subr.mxu0 0.0
    %1176 = vmatpush1.msra.mxu0 0.0
    %1177 = vmatprep.subr.mxu0 0.0
    %1178 = vmatpush1.msra.mxu0 0.0
    %1179 = vmatprep.subr.mxu0 0.0
    %1180 = vmatpush1.msra.mxu0 0.0
    %1181 = vmatprep.subr.mxu0 0.0
    %1182 = vmatpush1.msra.mxu0 0.0
    %1183 = vmatprep.subr.mxu0 0.0
    %1184 = vmatpush1.msra.mxu0 0.0
    %1185 = vmatprep.subr.mxu0 0.0
    %1186 = vmatpush1.msra.mxu0 0.0
    %1187 = vmatprep.subr.mxu0 0.0
    %1188 = vmatpush1.msra.mxu0 0.0
    %1189 = vmatprep.subr.mxu0 0.0
    %1190 = vmatpush1.msra.mxu0 0.0
    %1191 = vmatprep.subr.mxu0 0.0
    %1192 = vmatpush1.msra.mxu0 0.0
    %1193 = vmatprep.subr.mxu0 0.0
    %1194 = vmatpush1.msra.mxu0 0.0
    %1195 = vmatprep.subr.mxu0 0.0
    %1196 = vmatpush1.msra.mxu0 0.0
    %1197 = vmatprep.subr.mxu0 0.0
    %1198 = vmatpush1.msra.mxu0 0.0
    %1199 = vmatprep.subr.mxu0 0.0
    %1200 = vmatpush1.msra.mxu0 0.0
    %1201 = vmatprep.subr.mxu0 0.0
    %1202 = vmatpush1.msra.mxu0 0.0
    %1203 = vmatprep.subr.mxu0 0.0
    %1204 = vmatpush1.msra.mxu0 0.0
    %1205 = vmatprep.subr.mxu0 0.0
    %1206 = vmatpush1.msra.mxu0 0.0
    %1207 = vmatprep.subr.mxu0 0.0
    %1208 = vmatpush1.msra.mxu0 0.0
    %1209 = vmatprep.subr.mxu0 0.0
    %1210 = vmatpush1.msra.mxu0 0.0
    %1211 = vmatprep.subr.mxu0 0.0
    %1212 = vmatpush1.msra.mxu0 0.0
    %1213 = vmatprep.mubr.f32.mxu0 0.0
    %v1214 = vand.u32 %v1145, 4294901760
    %v1215 = vsub.f32 %v1145, %v1214
    %v1216 = vand.u32 %v1215, 4294901760
    %v1217 = vsub.f32 %v1215, %v1216
    %v1218 = vand.u32 %v1217, 4294901760
    %1219 = vmatmul.mubr.f32.gmra.mrb[0].mxu0 %v1218
    %v1220 = vpop.f32.mrb[0].mxu0
    %v1221 = vadd.f32 %v1142, %v1220
    %v1222 = vpop.f32.mrb[0].mxu0
    %v1223 = vadd.f32 %v1143, %v1222
    %1224 = vdwg.mxu0
    %v1225 = vand.u32 %v1140, 4294901760
    %v1226 = vsub.f32 %v1140, %v1225
    %v1227 = vand.u32 %v1226, 4294901760
    %v1228 = vsub.f32 %v1226, %v1227
    %v1229 = vand.u32 %v1228, 4294901760
    %1230 = vmatprep.subr.mxu0 %v1229
    %v1231 = vand.u32 %v1139, 4294901760
    %v1232 = vsub.f32 %v1139, %v1231
    %v1233 = vand.u32 %v1232, 4294901760
    %v1234 = vsub.f32 %v1232, %v1233
    %v1235 = vand.u32 %v1234, 4294901760
    %1236 = vmatpush1.msra.mxu0 %v1235
    %1237 = vmatprep.subr.mxu0 0.0
    %1238 = vmatpush1.msra.mxu0 0.0
    %1239 = vmatprep.subr.mxu0 0.0
    %1240 = vmatpush1.msra.mxu0 0.0
    %1241 = vmatprep.subr.mxu0 0.0
    %1242 = vmatpush1.msra.mxu0 0.0
    %1243 = vmatprep.subr.mxu0 0.0
    %1244 = vmatpush1.msra.mxu0 0.0
    %1245 = vmatprep.subr.mxu0 0.0
    %1246 = vmatpush1.msra.mxu0 0.0
    %1247 = vmatprep.subr.mxu0 0.0
    %1248 = vmatpush1.msra.mxu0 0.0
    %1249 = vmatprep.subr.mxu0 0.0
    %1250 = vmatpush1.msra.mxu0 0.0
    %1251 = vmatprep.subr.mxu0 0.0
    %1252 = vmatpush1.msra.mxu0 0.0
    %1253 = vmatprep.subr.mxu0 0.0
    %1254 = vmatpush1.msra.mxu0 0.0
    %1255 = vmatprep.subr.mxu0 0.0
    %1256 = vmatpush1.msra.mxu0 0.0
    %1257 = vmatprep.subr.mxu0 0.0
    %1258 = vmatpush1.msra.mxu0 0.0
    %1259 = vmatprep.subr.mxu0 0.0
    %1260 = vmatpush1.msra.mxu0 0.0
    %1261 = vmatprep.subr.mxu0 0.0
    %1262 = vmatpush1.msra.mxu0 0.0
    %1263 = vmatprep.subr.mxu0 0.0
    %1264 = vmatpush1.msra.mxu0 0.0
    %1265 = vmatprep.subr.mxu0 0.0
    %1266 = vmatpush1.msra.mxu0 0.0
    %1267 = vmatprep.subr.mxu0 0.0
    %1268 = vmatpush1.msra.mxu0 0.0
    %1269 = vmatprep.subr.mxu0 0.0
    %1270 = vmatpush1.msra.mxu0 0.0
    %1271 = vmatprep.subr.mxu0 0.0
    %1272 = vmatpush1.msra.mxu0 0.0
    %1273 = vmatprep.subr.mxu0 0.0
    %1274 = vmatpush1.msra.mxu0 0.0
    %1275 = vmatprep.subr.mxu0 0.0
    %1276 = vmatpush1.msra.mxu0 0.0
    %1277 = vmatprep.subr.mxu0 0.0
    %1278 = vmatpush1.msra.mxu0 0.0
    %1279 = vmatprep.subr.mxu0 0.0
    %1280 = vmatpush1.msra.mxu0 0.0
    %1281 = vmatprep.subr.mxu0 0.0
    %1282 = vmatpush1.msra.mxu0 0.0
    %1283 = vmatprep.subr.mxu0 0.0
    %1284 = vmatpush1.msra.mxu0 0.0
    %1285 = vmatprep.subr.mxu0 0.0
    %1286 = vmatpush1.msra.mxu0 0.0
    %1287 = vmatprep.subr.mxu0 0.0
    %1288 = vmatpush1.msra.mxu0 0.0
    %1289 = vmatprep.subr.mxu0 0.0
    %1290 = vmatpush1.msra.mxu0 0.0
    %1291 = vmatprep.subr.mxu0 0.0
    %1292 = vmatpush1.msra.mxu0 0.0
    %1293 = vmatprep.subr.mxu0 0.0
    %1294 = vmatpush1.msra.mxu0 0.0
    %1295 = vmatprep.subr.mxu0 0.0
    %1296 = vmatpush1.msra.mxu0 0.0
    %1297 = vmatprep.subr.mxu0 0.0
    %1298 = vmatpush1.msra.mxu0 0.0
    %1299 = vmatprep.mubr.f32.mxu0 0.0
    %v1300 = vand.u32 %v1145, 4294901760
    %1301 = vmatmul.mubr.f32.gmra.mrb[0].mxu0 %v1300
    %v1302 = vpop.f32.mrb[0].mxu0
    %v1303 = vadd.f32 %v1221, %v1302
    %v1304 = vpop.f32.mrb[0].mxu0
    %v1305 = vadd.f32 %v1223, %v1304
    %1306 = vdwg.mxu0
    %v1307 = vand.u32 %v1140, 4294901760
    %v1308 = vsub.f32 %v1140, %v1307
    %1309 = vmatprep.subr.mxu0 %v1308
    %v1310 = vand.u32 %v1139, 4294901760
    %v1311 = vsub.f32 %v1139, %v1310
    %1312 = vmatpush1.msra.mxu0 %v1311
    %1313 = vmatprep.subr.mxu0 0.0
    %1314 = vmatpush1.msra.mxu0 0.0
    %1315 = vmatprep.subr.mxu0 0.0
    %1316 = vmatpush1.msra.mxu0 0.0
    %1317 = vmatprep.subr.mxu0 0.0
    %1318 = vmatpush1.msra.mxu0 0.0
    %1319 = vmatprep.subr.mxu0 0.0
    %1320 = vmatpush1.msra.mxu0 0.0
    %1321 = vmatprep.subr.mxu0 0.0
    %1322 = vmatpush1.msra.mxu0 0.0
    %1323 = vmatprep.subr.mxu0 0.0
    %1324 = vmatpush1.msra.mxu0 0.0
    %1325 = vmatprep.subr.mxu0 0.0
    %1326 = vmatpush1.msra.mxu0 0.0
    %1327 = vmatprep.subr.mxu0 0.0
    %1328 = vmatpush1.msra.mxu0 0.0
    %1329 = vmatprep.subr.mxu0 0.0
    %1330 = vmatpush1.msra.mxu0 0.0
    %1331 = vmatprep.subr.mxu0 0.0
    %1332 = vmatpush1.msra.mxu0 0.0
    %1333 = vmatprep.subr.mxu0 0.0
    %1334 = vmatpush1.msra.mxu0 0.0
    %1335 = vmatprep.subr.mxu0 0.0
    %1336 = vmatpush1.msra.mxu0 0.0
    %1337 = vmatprep.subr.mxu0 0.0
    %1338 = vmatpush1.msra.mxu0 0.0
    %1339 = vmatprep.subr.mxu0 0.0
    %1340 = vmatpush1.msra.mxu0 0.0
    %1341 = vmatprep.subr.mxu0 0.0
    %1342 = vmatpush1.msra.mxu0 0.0
    %1343 = vmatprep.subr.mxu0 0.0
    %1344 = vmatpush1.msra.mxu0 0.0
    %1345 = vmatprep.subr.mxu0 0.0
    %1346 = vmatpush1.msra.mxu0 0.0
    %1347 = vmatprep.subr.mxu0 0.0
    %1348 = vmatpush1.msra.mxu0 0.0
    %1349 = vmatprep.subr.mxu0 0.0
    %1350 = vmatpush1.msra.mxu0 0.0
    %1351 = vmatprep.subr.mxu0 0.0
    %1352 = vmatpush1.msra.mxu0 0.0
    %1353 = vmatprep.subr.mxu0 0.0
    %1354 = vmatpush1.msra.mxu0 0.0
    %1355 = vmatprep.subr.mxu0 0.0
    %1356 = vmatpush1.msra.mxu0 0.0
    %1357 = vmatprep.subr.mxu0 0.0
    %1358 = vmatpush1.msra.mxu0 0.0
    %1359 = vmatprep.subr.mxu0 0.0
    %1360 = vmatpush1.msra.mxu0 0.0
    %1361 = vmatprep.subr.mxu0 0.0
    %1362 = vmatpush1.msra.mxu0 0.0
    %1363 = vmatprep.subr.mxu0 0.0
    %1364 = vmatpush1.msra.mxu0 0.0
    %1365 = vmatprep.subr.mxu0 0.0
    %1366 = vmatpush1.msra.mxu0 0.0
    %1367 = vmatprep.subr.mxu0 0.0
    %1368 = vmatpush1.msra.mxu0 0.0
    %1369 = vmatprep.subr.mxu0 0.0
    %1370 = vmatpush1.msra.mxu0 0.0
    %1371 = vmatprep.subr.mxu0 0.0
    %1372 = vmatpush1.msra.mxu0 0.0
    %1373 = vmatprep.subr.mxu0 0.0
    %1374 = vmatpush1.msra.mxu0 0.0
    %1375 = vmatprep.mubr.f32.mxu0 0.0
    %v1376 = vand.u32 %v1145, 4294901760
    %v1377 = vsub.f32 %v1145, %v1376
    %1378 = vmatmul.mubr.f32.gmra.mrb[0].mxu0 %v1377
    %v1379 = vpop.f32.mrb[0].mxu0
    %v1380 = vadd.f32 %v1303, %v1379
    %v1381 = vpop.f32.mrb[0].mxu0
    %v1382 = vadd.f32 %v1305, %v1381
    %1383 = vdwg.mxu0
    %v1384 = vand.u32 %v1140, 4294901760
    %1385 = vmatprep.subr.mxu0 %v1384
    %v1386 = vand.u32 %v1139, 4294901760
    %1387 = vmatpush1.msra.mxu0 %v1386
    %1388 = vmatprep.subr.mxu0 0.0
    %1389 = vmatpush1.msra.mxu0 0.0
    %1390 = vmatprep.subr.mxu0 0.0
    %1391 = vmatpush1.msra.mxu0 0.0
    %1392 = vmatprep.subr.mxu0 0.0
    %1393 = vmatpush1.msra.mxu0 0.0
    %1394 = vmatprep.subr.mxu0 0.0
    %1395 = vmatpush1.msra.mxu0 0.0
    %1396 = vmatprep.subr.mxu0 0.0
    %1397 = vmatpush1.msra.mxu0 0.0
    %1398 = vmatprep.subr.mxu0 0.0
    %1399 = vmatpush1.msra.mxu0 0.0
    %1400 = vmatprep.subr.mxu0 0.0
    %1401 = vmatpush1.msra.mxu0 0.0
    %1402 = vmatprep.subr.mxu0 0.0
    %1403 = vmatpush1.msra.mxu0 0.0
    %1404 = vmatprep.subr.mxu0 0.0
    %1405 = vmatpush1.msra.mxu0 0.0
    %1406 = vmatprep.subr.mxu0 0.0
    %1407 = vmatpush1.msra.mxu0 0.0
    %1408 = vmatprep.subr.mxu0 0.0
    %1409 = vmatpush1.msra.mxu0 0.0
    %1410 = vmatprep.subr.mxu0 0.0
    %1411 = vmatpush1.msra.mxu0 0.0
    %1412 = vmatprep.subr.mxu0 0.0
    %1413 = vmatpush1.msra.mxu0 0.0
    %1414 = vmatprep.subr.mxu0 0.0
    %1415 = vmatpush1.msra.mxu0 0.0
    %1416 = vmatprep.subr.mxu0 0.0
    %1417 = vmatpush1.msra.mxu0 0.0
    %1418 = vmatprep.subr.mxu0 0.0
    %1419 = vmatpush1.msra.mxu0 0.0
    %1420 = vmatprep.subr.mxu0 0.0
    %1421 = vmatpush1.msra.mxu0 0.0
    %1422 = vmatprep.subr.mxu0 0.0
    %1423 = vmatpush1.msra.mxu0 0.0
    %1424 = vmatprep.subr.mxu0 0.0
    %1425 = vmatpush1.msra.mxu0 0.0
    %1426 = vmatprep.subr.mxu0 0.0
    %1427 = vmatpush1.msra.mxu0 0.0
    %1428 = vmatprep.subr.mxu0 0.0
    %1429 = vmatpush1.msra.mxu0 0.0
    %1430 = vmatprep.subr.mxu0 0.0
    %1431 = vmatpush1.msra.mxu0 0.0
    %1432 = vmatprep.subr.mxu0 0.0
    %1433 = vmatpush1.msra.mxu0 0.0
    %1434 = vmatprep.subr.mxu0 0.0
    %1435 = vmatpush1.msra.mxu0 0.0
    %1436 = vmatprep.subr.mxu0 0.0
    %1437 = vmatpush1.msra.mxu0 0.0
    %1438 = vmatprep.subr.mxu0 0.0
    %1439 = vmatpush1.msra.mxu0 0.0
    %1440 = vmatprep.subr.mxu0 0.0
    %1441 = vmatpush1.msra.mxu0 0.0
    %1442 = vmatprep.subr.mxu0 0.0
    %1443 = vmatpush1.msra.mxu0 0.0
    %1444 = vmatprep.subr.mxu0 0.0
    %1445 = vmatpush1.msra.mxu0 0.0
    %1446 = vmatprep.subr.mxu0 0.0
    %1447 = vmatpush1.msra.mxu0 0.0
    %1448 = vmatprep.subr.mxu0 0.0
    %1449 = vmatpush1.msra.mxu0 0.0
    %1450 = vmatprep.mubr.f32.mxu0 0.0
    %v1451 = vand.u32 %v1145, 4294901760
    %v1452 = vsub.f32 %v1145, %v1451
    %v1453 = vand.u32 %v1452, 4294901760
    %1454 = vmatmul.mubr.f32.gmra.mrb[0].mxu0 %v1453
    %v1455 = vpop.f32.mrb[0].mxu0
    %v1456 = vadd.f32 %v1380, %v1455
    %v1457 = vpop.f32.mrb[0].mxu0
    %v1458 = vadd.f32 %v1382, %v1457
    %1459 = vdwg.mxu0
    %v1460 = vand.u32 %v1140, 4294901760
    %v1461 = vsub.f32 %v1140, %v1460
    %v1462 = vand.u32 %v1461, 4294901760
    %1463 = vmatprep.subr.mxu0 %v1462
    %v1464 = vand.u32 %v1139, 4294901760
    %v1465 = vsub.f32 %v1139, %v1464
    %v1466 = vand.u32 %v1465, 4294901760
    %1467 = vmatpush1.msra.mxu0 %v1466
    %1468 = vmatprep.subr.mxu0 0.0
    %1469 = vmatpush1.msra.mxu0 0.0
    %1470 = vmatprep.subr.mxu0 0.0
    %1471 = vmatpush1.msra.mxu0 0.0
    %1472 = vmatprep.subr.mxu0 0.0
    %1473 = vmatpush1.msra.mxu0 0.0
    %1474 = vmatprep.subr.mxu0 0.0
    %1475 = vmatpush1.msra.mxu0 0.0
    %1476 = vmatprep.subr.mxu0 0.0
    %1477 = vmatpush1.msra.mxu0 0.0
    %1478 = vmatprep.subr.mxu0 0.0
    %1479 = vmatpush1.msra.mxu0 0.0
    %1480 = vmatprep.subr.mxu0 0.0
    %1481 = vmatpush1.msra.mxu0 0.0
    %1482 = vmatprep.subr.mxu0 0.0
    %1483 = vmatpush1.msra.mxu0 0.0
    %1484 = vmatprep.subr.mxu0 0.0
    %1485 = vmatpush1.msra.mxu0 0.0
    %1486 = vmatprep.subr.mxu0 0.0
    %1487 = vmatpush1.msra.mxu0 0.0
    %1488 = vmatprep.subr.mxu0 0.0
    %1489 = vmatpush1.msra.mxu0 0.0
    %1490 = vmatprep.subr.mxu0 0.0
    %1491 = vmatpush1.msra.mxu0 0.0
    %1492 = vmatprep.subr.mxu0 0.0
    %1493 = vmatpush1.msra.mxu0 0.0
    %1494 = vmatprep.subr.mxu0 0.0
    %1495 = vmatpush1.msra.mxu0 0.0
    %1496 = vmatprep.subr.mxu0 0.0
    %1497 = vmatpush1.msra.mxu0 0.0
    %1498 = vmatprep.subr.mxu0 0.0
    %1499 = vmatpush1.msra.mxu0 0.0
    %1500 = vmatprep.subr.mxu0 0.0
    %1501 = vmatpush1.msra.mxu0 0.0
    %1502 = vmatprep.subr.mxu0 0.0
    %1503 = vmatpush1.msra.mxu0 0.0
    %1504 = vmatprep.subr.mxu0 0.0
    %1505 = vmatpush1.msra.mxu0 0.0
    %1506 = vmatprep.subr.mxu0 0.0
    %1507 = vmatpush1.msra.mxu0 0.0
    %1508 = vmatprep.subr.mxu0 0.0
    %1509 = vmatpush1.msra.mxu0 0.0
    %1510 = vmatprep.subr.mxu0 0.0
    %1511 = vmatpush1.msra.mxu0 0.0
    %1512 = vmatprep.subr.mxu0 0.0
    %1513 = vmatpush1.msra.mxu0 0.0
    %1514 = vmatprep.subr.mxu0 0.0
    %1515 = vmatpush1.msra.mxu0 0.0
    %1516 = vmatprep.subr.mxu0 0.0
    %1517 = vmatpush1.msra.mxu0 0.0
    %1518 = vmatprep.subr.mxu0 0.0
    %1519 = vmatpush1.msra.mxu0 0.0
    %1520 = vmatprep.subr.mxu0 0.0
    %1521 = vmatpush1.msra.mxu0 0.0
    %1522 = vmatprep.subr.mxu0 0.0
    %1523 = vmatpush1.msra.mxu0 0.0
    %1524 = vmatprep.subr.mxu0 0.0
    %1525 = vmatpush1.msra.mxu0 0.0
    %1526 = vmatprep.subr.mxu0 0.0
    %1527 = vmatpush1.msra.mxu0 0.0
    %1528 = vmatprep.subr.mxu0 0.0
    %1529 = vmatpush1.msra.mxu0 0.0
    %1530 = vmatprep.mubr.f32.mxu0 0.0
    %v1531 = vand.u32 %v1145, 4294901760
    %1532 = vmatmul.mubr.f32.gmra.mrb[0].mxu0 %v1531
    %v1533 = vpop.f32.mrb[0].mxu0
    %v1534 = vadd.f32 %v1456, %v1533
    %v1535 = vpop.f32.mrb[0].mxu0
    %v1536 = vadd.f32 %v1458, %v1535
    %1537 = vdwg.mxu0
    %v1538 = vand.u32 %v1140, 4294901760
    %1539 = vmatprep.subr.mxu0 %v1538
    %v1540 = vand.u32 %v1139, 4294901760
    %1541 = vmatpush1.msra.mxu0 %v1540
    %1542 = vmatprep.subr.mxu0 0.0
    %1543 = vmatpush1.msra.mxu0 0.0
    %1544 = vmatprep.subr.mxu0 0.0
    %1545 = vmatpush1.msra.mxu0 0.0
    %1546 = vmatprep.subr.mxu0 0.0
    %1547 = vmatpush1.msra.mxu0 0.0
    %1548 = vmatprep.subr.mxu0 0.0
    %1549 = vmatpush1.msra.mxu0 0.0
    %1550 = vmatprep.subr.mxu0 0.0
    %1551 = vmatpush1.msra.mxu0 0.0
    %1552 = vmatprep.subr.mxu0 0.0
    %1553 = vmatpush1.msra.mxu0 0.0
    %1554 = vmatprep.subr.mxu0 0.0
    %1555 = vmatpush1.msra.mxu0 0.0
    %1556 = vmatprep.subr.mxu0 0.0
    %1557 = vmatpush1.msra.mxu0 0.0
    %1558 = vmatprep.subr.mxu0 0.0
    %1559 = vmatpush1.msra.mxu0 0.0
    %1560 = vmatprep.subr.mxu0 0.0
    %1561 = vmatpush1.msra.mxu0 0.0
    %1562 = vmatprep.subr.mxu0 0.0
    %1563 = vmatpush1.msra.mxu0 0.0
    %1564 = vmatprep.subr.mxu0 0.0
    %1565 = vmatpush1.msra.mxu0 0.0
    %1566 = vmatprep.subr.mxu0 0.0
    %1567 = vmatpush1.msra.mxu0 0.0
    %1568 = vmatprep.subr.mxu0 0.0
    %1569 = vmatpush1.msra.mxu0 0.0
    %1570 = vmatprep.subr.mxu0 0.0
    %1571 = vmatpush1.msra.mxu0 0.0
    %1572 = vmatprep.subr.mxu0 0.0
    %1573 = vmatpush1.msra.mxu0 0.0
    %1574 = vmatprep.subr.mxu0 0.0
    %1575 = vmatpush1.msra.mxu0 0.0
    %1576 = vmatprep.subr.mxu0 0.0
    %1577 = vmatpush1.msra.mxu0 0.0
    %1578 = vmatprep.subr.mxu0 0.0
    %1579 = vmatpush1.msra.mxu0 0.0
    %1580 = vmatprep.subr.mxu0 0.0
    %1581 = vmatpush1.msra.mxu0 0.0
    %1582 = vmatprep.subr.mxu0 0.0
    %1583 = vmatpush1.msra.mxu0 0.0
    %1584 = vmatprep.subr.mxu0 0.0
    %1585 = vmatpush1.msra.mxu0 0.0
    %1586 = vmatprep.subr.mxu0 0.0
    %1587 = vmatpush1.msra.mxu0 0.0
    %1588 = vmatprep.subr.mxu0 0.0
    %1589 = vmatpush1.msra.mxu0 0.0
    %1590 = vmatprep.subr.mxu0 0.0
    %1591 = vmatpush1.msra.mxu0 0.0
    %1592 = vmatprep.subr.mxu0 0.0
    %1593 = vmatpush1.msra.mxu0 0.0
    %1594 = vmatprep.subr.mxu0 0.0
    %1595 = vmatpush1.msra.mxu0 0.0
    %1596 = vmatprep.subr.mxu0 0.0
    %1597 = vmatpush1.msra.mxu0 0.0
    %1598 = vmatprep.subr.mxu0 0.0
    %1599 = vmatpush1.msra.mxu0 0.0
    %1600 = vmatprep.subr.mxu0 0.0
    %1601 = vmatpush1.msra.mxu0 0.0
    %1602 = vmatprep.subr.mxu0 0.0
    %1603 = vmatpush1.msra.mxu0 0.0
    %1604 = vmatprep.mubr.f32.mxu0 0.0
    %v1605 = vand.u32 %v1145, 4294901760
    %1606 = vmatmul.mubr.f32.gmra.mrb[0].mxu0 %v1605
    %v1607 = vpop.f32.mrb[0].mxu0
    %v1608 = vadd.f32 %v1534, %v1607
    %v1609 = vpop.f32.mrb[0].mxu0
    %v1610 = vadd.f32 %v1536, %v1609
    %1611 = vdwg.mxu0
    %1612 = vst [vmem:[%s2] sm:$0xff] %v1608
    %1613 = vst [vmem:[%s2 + $0x8] sm:$0xff] %v1610
    // Predicated region
    $region14: #{fwd.1} parent=1 // pred_check
      _
    $region15: #{fwd.1} parent=1 // pred_check_branch
      %1615 = sbr.rel (0) target = $region17
    $region16: #{fwd.1} parent=1 // pred_region
      _
    $region17: #{fwd.1} parent=1 // pred_fallthru
      _
    // Predicated region
    $region18: #{fwd.1} parent=1 // pred_check
      _
    $region19: #{fwd.1} parent=1 // pred_check_branch
      %1617 = sbr.rel (0) target = $region21
    $region20: #{fwd.1} parent=1 // pred_region
      _
    $region21: #{fwd.1} parent=1 // pred_fallthru
      _
    %1618 = vsyncpa [#allocation3], 1

</llo_original>
